<compile_context>
chip_gen: v6e
topology: v6e:2x2x1
jax: 0.10.0
libtpu: 0.0.40
codegen_flags: <defaults>
</compile_context>

<pallas_src>
import functools

import jax
import jax.numpy as jnp
from jax.experimental import pallas as pl
from jax.experimental.pallas import tpu as pltpu

# ----------------------------------------------------------------------------
# Pallas kernel: tiled dense propagate  out = relu?(A @ M + bias)
# ----------------------------------------------------------------------------

_TILE = 256   # row / reduction tile (256-512 per review; 256 keeps v7x VMEM headroom)
_LANE = 128   # feature dim padded to a multiple of this -> lane-dense stores


def _round_up(x, m):
    return ((x + m - 1) // m) * m


def _propagate_kernel(apply_relu, a_ref, m_ref, b_ref, o_ref, acc_ref):
    # grid = (row tile i ["parallel"], reduction tile k ["arbitrary"])
    @pl.when(pl.program_id(1) == 0)
    def _init():
        acc_ref[...] = jnp.zeros_like(acc_ref)

    acc_ref[...] += jnp.dot(a_ref[...], m_ref[...],
                            preferred_element_type=jnp.float32)

    @pl.when(pl.program_id(1) == pl.num_programs(1) - 1)
    def _finalize():
        r = acc_ref[...] + b_ref[...]
        if apply_relu:
            r = jnp.maximum(r, 0.0)
        o_ref[...] = r


def _pallas_propagate(a, m, b, apply_relu):
    """relu?(A @ M + b): bf16 operands, f32 accumulation, tiled over A rows/cols."""
    n = a.shape[0]
    f = m.shape[1]
    n_pad = _round_up(n, _TILE)
    f_pad = _round_up(f, _LANE)

    a_p = jnp.pad(a.astype(jnp.bfloat16), ((0, n_pad - n), (0, n_pad - n)))
    m_p = jnp.pad(m.astype(jnp.bfloat16), ((0, n_pad - n), (0, f_pad - f)))
    b_p = jnp.pad(b.astype(jnp.float32), (0, f_pad - f)).reshape(1, f_pad)

    tm = tk = _TILE
    out = pl.pallas_call(
        functools.partial(_propagate_kernel, apply_relu),
        out_shape=jax.ShapeDtypeStruct((n_pad, f_pad), jnp.float32),
        grid=(n_pad // tm, n_pad // tk),
        in_specs=[
            pl.BlockSpec((tm, tk), lambda i, k: (i, k)),      # A row/col tile
            pl.BlockSpec((tk, f_pad), lambda i, k: (k, 0)),   # (X W) reduction tile
            pl.BlockSpec((1, f_pad), lambda i, k: (0, 0)),    # bias (lane-dense)
        ],
        out_specs=pl.BlockSpec((tm, f_pad), lambda i, k: (i, 0)),
        scratch_shapes=[pltpu.VMEM((tm, f_pad), jnp.float32)],
        compiler_params=pltpu.CompilerParams(
            dimension_semantics=("parallel", "arbitrary"),
            vmem_limit_bytes=32 * 1024 * 1024,
        ),
    )(a_p, m_p, b_p)
    return out[:n, :f]


def _jnp_propagate(a, m, b, apply_relu):
    """Plain-JAX reference with the same bf16/f32 precision choices."""
    out = jnp.dot(a.astype(jnp.bfloat16), m.astype(jnp.bfloat16),
                  preferred_element_type=jnp.float32) + b[None, :].astype(jnp.float32)
    return jnp.maximum(out, 0.0) if apply_relu else out


# ----------------------------------------------------------------------------
# SAG_GCN forward (wrapper does the cheap / data-dependent parts)
# ----------------------------------------------------------------------------

_POOLING_RATIOS = (0.75, 0.75, 0.75)   # SAG_GCN(pooling_ratio=["0.75 0.75 0.75"], n_layers=3)


@functools.partial(jax.jit, static_argnames=("num_graphs", "use_pallas"))
def sag_gcn_forward(x, edge_index, batch, params, *, num_graphs, use_pallas=True):
    propagate = _pallas_propagate if use_pallas else _jnp_propagate

    n = x.shape[0]
    src, dst = edge_index[0], edge_index[1]
    node_idx = jnp.arange(n)
    graph_ids = jnp.arange(num_graphs)

    alive = jnp.ones((n,), jnp.float32)                       # node mask (SAGPooling keep)
    edge_alive = jnp.ones((src.shape[0],), jnp.float32)       # edge mask (FilterEdges)

    h = x
    readouts = []
    for li, layer in enumerate(params["layers"]):
        # ---- GCNConv on the surviving subgraph: relu(A_hat @ (h W) + b) --------
        deg = jnp.zeros((n,), jnp.float32).at[dst].add(edge_alive) + alive   # + self loops
        dinv = jnp.where(deg > 0, jax.lax.rsqrt(deg), 0.0)
        a_hat = jnp.zeros((n, n), jnp.float32).at[dst, src].add(
            dinv[dst] * dinv[src] * edge_alive)
        a_hat = a_hat + jnp.diag(dinv * dinv * alive)

        xw = h @ layer["w_conv"]                               # hoisted X @ W (tiny)
        h_conv = propagate(a_hat, xw, layer["b_conv"], True)   # Pallas A-sweep
        h_conv = h_conv * alive[:, None]                       # removed nodes stay zero

        # ---- SAGPooling score GNN: GraphConv(hidden, 1) on the same edges ------
        a_plain = jnp.zeros((n, n), jnp.float32).at[dst, src].add(edge_alive)
        aggr = propagate(a_plain, h_conv, jnp.zeros_like(layer["b_conv"]), False)
        attn = (aggr @ layer["w_rel"] + h_conv @ layer["w_root"] + layer["b_gnn"])[:, 0]

        # SelectTopK(1, ratio, nonlinearity='tanh'): score = tanh(attn * w / |w|)
        sel_sign = layer["sel_w"] / jnp.sqrt(layer["sel_w"] ** 2 + 1e-12)
        score = jnp.tanh(attn * sel_sign)

        # top-k per graph among currently-alive nodes, k = ceil(ratio * n_g)
        ratio = _POOLING_RATIOS[li]
        n_alive_g = jnp.zeros((num_graphs,), jnp.float32).at[batch].add(alive)
        k_g = jnp.ceil(ratio * n_alive_g).astype(jnp.int32)
        msk_score = jnp.where(alive > 0, score, -jnp.inf)
        better = (msk_score[None, :] > msk_score[:, None]) | (
            (msk_score[None, :] == msk_score[:, None])
            & (node_idx[None, :] < node_idx[:, None]))
        same = (batch[None, :] == batch[:, None]) & (alive[None, :] > 0)
        rank = jnp.sum(better & same, axis=1).astype(jnp.int32)
        keep = (alive > 0) & (rank < k_g[batch])
        alive = keep.astype(jnp.float32)

        # x' = (x * tanh(score))_kept ; FilterEdges keeps edges with both ends kept
        h = h_conv * score[:, None] * alive[:, None]
        edge_alive = edge_alive * alive[src] * alive[dst]

        # ---- readout: concat(global_max_pool, global_mean_pool) over kept nodes
        onehot = (batch[None, :] == graph_ids[:, None]).astype(jnp.float32) * alive[None, :]
        counts = onehot.sum(axis=1, keepdims=True)
        mean_p = (onehot @ h) / jnp.maximum(counts, 1.0)
        masked = jnp.where(onehot[:, :, None] > 0, h[None, :, :], -jnp.inf)
        max_p = jnp.where(counts > 0, jnp.max(masked, axis=1), 0.0)
        readouts.append(jnp.concatenate([max_p, mean_p], axis=1))

    z = sum(readouts)                                          # [G, 2*hidden]
    head = params["head"]
    z = jnp.maximum(z @ head["w_lin1"] + head["b_lin1"], 0.0)
    # TODO(synk): dropout(p=0.5) is eval-mode identity (no random masking applied).
    z = jnp.maximum(z @ head["w_lin2"] + head["b_lin2"], 0.0)
    logits = z @ head["w_lin3"] + head["b_lin3"]
    y_prob = jax.nn.softmax(logits, axis=-1)
    return logits, y_prob


# ----------------------------------------------------------------------------
# Parameters
# ----------------------------------------------------------------------------

def init_params(key, input_dim, hidden_dim, n_layers=3):
    layers = []
    for i in range(n_layers):
        fin = input_dim if i == 0 else hidden_dim
        key, k0, k1, k2, k3 = jax.random.split(key, 5)
        layers.append({
            "w_conv": jax.random.normal(k0, (fin, hidden_dim), jnp.float32) / jnp.sqrt(float(fin)),
            "b_conv": jnp.zeros((hidden_dim,), jnp.float32),
            "w_rel":  jax.random.normal(k1, (hidden_dim, 1), jnp.float32) / jnp.sqrt(float(hidden_dim)),
            "w_root": jax.random.normal(k2, (hidden_dim, 1), jnp.float32) / jnp.sqrt(float(hidden_dim)),
            "b_gnn":  jnp.zeros((1,), jnp.float32),
            "sel_w":  jax.random.normal(k3, (), jnp.float32) + 2.0,   # SelectTopK scalar weight
        })
    h2, hh, he = 2 * hidden_dim, hidden_dim // 2, hidden_dim // 8
    key, k1, k2, k3 = jax.random.split(key, 4)
    head = {
        "w_lin1": jax.random.normal(k1, (h2, hh), jnp.float32) / jnp.sqrt(float(h2)),
        "b_lin1": jnp.zeros((hh,), jnp.float32),
        "w_lin2": jax.random.normal(k2, (hh, he), jnp.float32) / jnp.sqrt(float(hh)),
        "b_lin2": jnp.zeros((he,), jnp.float32),
        "w_lin3": jax.random.normal(k3, (he, 2), jnp.float32) / jnp.sqrt(float(he)),
        "b_lin3": jnp.zeros((2,), jnp.float32),
    }
    return {"layers": layers, "head": head}


# ----------------------------------------------------------------------------
# Demo
# ----------------------------------------------------------------------------

if __name__ == "__main__":
    key = jax.random.PRNGKey(0)
    k_x, k_e0, k_e1, k_p = jax.random.split(key, 4)

    INPUT_DIM, HIDDEN_DIM, N_LAYERS = 8, 32, 3
    NODES_PER_GRAPH, EDGES_PER_GRAPH, NUM_GRAPHS = 150, 300, 2
    N = NODES_PER_GRAPH * NUM_GRAPHS          # 300 nodes -> padded to 512 -> 2x2 grid

    x = jax.random.normal(k_x, (N, INPUT_DIM), jnp.float32)

    def make_edges(k, n_nodes, n_edges, base):
        ks, ko = jax.random.split(k)
        s = jax.random.randint(ks, (n_edges,), 0, n_nodes, dtype=jnp.int32)
        off = jax.random.randint(ko, (n_edges,), 1, n_nodes, dtype=jnp.int32)
        d = (s + off) % n_nodes               # directed edges, no self-loops
        return jnp.stack([s + base, d + base])

    e0 = make_edges(k_e0, NODES_PER_GRAPH, EDGES_PER_GRAPH, 0)
    e1 = make_edges(k_e1, NODES_PER_GRAPH, EDGES_PER_GRAPH, NODES_PER_GRAPH)
    edge_index = jnp.concatenate([e0, e1], axis=1)                  # [2, 600]
    batch = jnp.concatenate([jnp.zeros(NODES_PER_GRAPH, jnp.int32),
                             jnp.ones(NODES_PER_GRAPH, jnp.int32)])

    params = init_params(k_p, INPUT_DIM, HIDDEN_DIM, N_LAYERS)

    logits, y_prob = sag_gcn_forward(x, edge_index, batch, params,
                                     num_graphs=NUM_GRAPHS, use_pallas=True)
    jax.block_until_ready((logits, y_prob))

    # sanity check against the plain-JAX path (same math & precision, no Pallas)
    ref_logits, ref_prob = sag_gcn_forward(x, edge_index, batch, params,
                                           num_graphs=NUM_GRAPHS, use_pallas=False)
    assert logits.shape == (NUM_GRAPHS, 2) and y_prob.shape == (NUM_GRAPHS, 2)
    assert bool(jnp.all(jnp.isfinite(logits)))
    assert jnp.allclose(logits, ref_logits, atol=5e-3, rtol=5e-3)
    assert jnp.allclose(y_prob, ref_prob, atol=5e-3, rtol=5e-3)
    assert jnp.allclose(jnp.sum(y_prob, axis=-1), 1.0, atol=1e-5)

    print("KERNEL_OK")
</pallas_src>

<mosaic_0001>
module attributes {stable_mosaic.version = 11 : i64} {
  func.func private @main(%arg0: i32) attributes {dimension_semantics = [#tpu.dimension_semantics<core_parallel>], iteration_bounds = array<i64: 2>, tpu.core_type = #tpu.core_type<sc_scalar_subcore>, window_params = []} {
    return
  }
}

module attributes {stable_mosaic.version = 11 : i64} {
  func.func private @main(%arg0: i32) attributes {dimension_semantics = [#tpu.dimension_semantics<core_parallel>], iteration_bounds = array<i64: 2>, tpu.core_type = #tpu.core_type<sc_scalar_subcore>, window_params = []} {
    return
  }
}

module attributes {stable_mosaic.version = 11 : i64} {
  func.func @_propagate_kernel(%arg0: i32, %arg1: i32, %arg2: memref<256x256xbf16, #tpu.memory_space<vmem>>, %arg3: memref<256x128xbf16, #tpu.memory_space<vmem>>, %arg4: memref<1x128xf32, #tpu.memory_space<vmem>>, %arg5: memref<256x128xf32, #tpu.memory_space<vmem>>, %arg6: memref<256x128xf32, #tpu.memory_space<vmem>>) attributes {dimension_semantics = [#tpu.dimension_semantics<parallel>, #tpu.dimension_semantics<arbitrary>], iteration_bounds = array<i64: 2, 2>, scalar_prefetch = 0 : i64, scratch_operands = 1 : i64, tpu.core_type = #tpu.core_type<tc>, window_params = [{transform_indices = @transform_0, window_bounds = array<i64: 256, 256>}, {transform_indices = @transform_1, window_bounds = array<i64: 256, 128>}, {pipeline_mode = #tpu.pipeline_mode<synchronous>, transform_indices = @transform_2, window_bounds = array<i64: 1, 128>}, {transform_indices = @transform_3, window_bounds = array<i64: 256, 128>}]} {
    %c0_i32 = arith.constant 0 : i32
    %0 = arith.cmpi eq, %arg1, %c0_i32 : i32
    %1 = arith.extui %0 : i1 to i32
    %c0_i32_0 = arith.constant 0 : i32
    %2 = arith.cmpi ne, %1, %c0_i32_0 : i32
    scf.if %2 {
      %cst_9 = arith.constant 0.000000e+00 : f32
      %12 = vector.broadcast %cst_9 : f32 to vector<256x128xf32>
      %c0_10 = arith.constant 0 : index
      %c0_11 = arith.constant 0 : index
      %13 = vector.load %arg6[%c0_10, %c0_11] : memref<256x128xf32, #tpu.memory_space<vmem>>, vector<256x128xf32>
      tpu.vector_store %arg6[%c0_10, %c0_11], %12 {strides = array<i32>} : memref<256x128xf32, #tpu.memory_space<vmem>>, vector<256x128xf32>,
    } else {
    }
    %c0 = arith.constant 0 : index
    %c0_1 = arith.constant 0 : index
    %3 = vector.load %arg6[%c0, %c0_1] : memref<256x128xf32, #tpu.memory_space<vmem>>, vector<256x128xf32>
    %c0_2 = arith.constant 0 : index
    %c0_3 = arith.constant 0 : index
    %4 = vector.load %arg2[%c0_2, %c0_3] : memref<256x256xbf16, #tpu.memory_space<vmem>>, vector<256x256xbf16>
    %c0_4 = arith.constant 0 : index
    %c0_5 = arith.constant 0 : index
    %5 = vector.load %arg3[%c0_4, %c0_5] : memref<256x128xbf16, #tpu.memory_space<vmem>>, vector<256x128xbf16>
    %cst = arith.constant dense<0.000000e+00> : vector<256x128xf32>
    %6 = tpu.matmul %4, %5, %cst {dimension_numbers = #tpu.dot_dimension_numbers<[1], [0], [0], [1], [0, 0, 1, 1], [], []>} : vector<256x256xbf16>, vector<256x128xbf16>, vector<256x128xf32> -> vector<256x128xf32>
    %7 = arith.addf %3, %6 : vector<256x128xf32>
    %c0_6 = arith.constant 0 : index
    %c0_7 = arith.constant 0 : index
    %8 = vector.load %arg6[%c0_6, %c0_7] : memref<256x128xf32, #tpu.memory_space<vmem>>, vector<256x128xf32>
    tpu.vector_store %arg6[%c0_6, %c0_7], %7 {strides = array<i32>} : memref<256x128xf32, #tpu.memory_space<vmem>>, vector<256x128xf32>,
    %c1_i32 = arith.constant 1 : i32
    %9 = arith.cmpi eq, %arg1, %c1_i32 : i32
    %10 = arith.extui %9 : i1 to i32
    %c0_i32_8 = arith.constant 0 : i32
    %11 = arith.cmpi ne, %10, %c0_i32_8 : i32
    scf.if %11 {
      %c0_9 = arith.constant 0 : index
      %c0_10 = arith.constant 0 : index
      %12 = vector.load %arg6[%c0_9, %c0_10] : memref<256x128xf32, #tpu.memory_space<vmem>>, vector<256x128xf32>
      %c0_11 = arith.constant 0 : index
      %c0_12 = arith.constant 0 : index
      %13 = vector.load %arg4[%c0_11, %c0_12] : memref<1x128xf32, #tpu.memory_space<vmem>>, vector<1x128xf32>
      %14 = vector.broadcast %13 : vector<1x128xf32> to vector<256x128xf32>
      %15 = arith.addf %12, %14 : vector<256x128xf32>
      %cst_13 = arith.constant 0.000000e+00 : f32
      %16 = vector.broadcast %cst_13 : f32 to vector<256x128xf32>
      %17 = arith.maximumf %15, %16 : vector<256x128xf32>
      %c0_14 = arith.constant 0 : index
      %c0_15 = arith.constant 0 : index
      %18 = vector.load %arg5[%c0_14, %c0_15] : memref<256x128xf32, #tpu.memory_space<vmem>>, vector<256x128xf32>
      tpu.vector_store %arg5[%c0_14, %c0_15], %17 {strides = array<i32>} : memref<256x128xf32, #tpu.memory_space<vmem>>, vector<256x128xf32>,
    } else {
    }
    return
  }
  func.func @transform_0(%arg0: i32, %arg1: i32) -> (i32, i32) {
    %c0_i32 = arith.constant 0 : i32
    return %arg0, %arg1 : i32, i32
  }
  func.func @transform_1(%arg0: i32, %arg1: i32) -> (i32, i32) {
    %c0_i32 = arith.constant 0 : i32
    %c0_i32_0 = arith.constant 0 : i32
    return %arg1, %c0_i32 : i32, i32
  }
  func.func @transform_2(%arg0: i32, %arg1: i32) -> (i32, i32) {
    %c0_i32 = arith.constant 0 : i32
    %c0_i32_0 = arith.constant 0 : i32
    %c0_i32_1 = arith.constant 0 : i32
    return %c0_i32, %c0_i32_0 : i32, i32
  }
  func.func @transform_3(%arg0: i32, %arg1: i32) -> (i32, i32) {
    %c0_i32 = arith.constant 0 : i32
    %c0_i32_0 = arith.constant 0 : i32
    return %arg0, %c0_i32 : i32, i32
  }
}

module attributes {stable_mosaic.version = 11 : i64} {
  func.func @_propagate_kernel(%arg0: i32, %arg1: i32, %arg2: memref<256x256xbf16, #tpu.memory_space<vmem>>, %arg3: memref<256x128xbf16, #tpu.memory_space<vmem>>, %arg4: memref<1x128xf32, #tpu.memory_space<vmem>>, %arg5: memref<256x128xf32, #tpu.memory_space<vmem>>, %arg6: memref<256x128xf32, #tpu.memory_space<vmem>>) attributes {dimension_semantics = [#tpu.dimension_semantics<parallel>, #tpu.dimension_semantics<arbitrary>], iteration_bounds = array<i64: 2, 2>, scalar_prefetch = 0 : i64, scratch_operands = 1 : i64, tpu.core_type = #tpu.core_type<tc>, window_params = [{transform_indices = @transform_0, window_bounds = array<i64: 256, 256>}, {transform_indices = @transform_1, window_bounds = array<i64: 256, 128>}, {pipeline_mode = #tpu.pipeline_mode<synchronous>, transform_indices = @transform_2, window_bounds = array<i64: 1, 128>}, {transform_indices = @transform_3, window_bounds = array<i64: 256, 128>}]} {
    %c0_i32 = arith.constant 0 : i32
    %0 = arith.cmpi eq, %arg1, %c0_i32 : i32
    %1 = arith.extui %0 : i1 to i32
    %c0_i32_0 = arith.constant 0 : i32
    %2 = arith.cmpi ne, %1, %c0_i32_0 : i32
    scf.if %2 {
      %cst_9 = arith.constant 0.000000e+00 : f32
      %12 = vector.broadcast %cst_9 : f32 to vector<256x128xf32>
      %c0_10 = arith.constant 0 : index
      %c0_11 = arith.constant 0 : index
      %13 = vector.load %arg6[%c0_10, %c0_11] : memref<256x128xf32, #tpu.memory_space<vmem>>, vector<256x128xf32>
      tpu.vector_store %arg6[%c0_10, %c0_11], %12 {strides = array<i32>} : memref<256x128xf32, #tpu.memory_space<vmem>>, vector<256x128xf32>,
    } else {
    }
    %c0 = arith.constant 0 : index
    %c0_1 = arith.constant 0 : index
    %3 = vector.load %arg6[%c0, %c0_1] : memref<256x128xf32, #tpu.memory_space<vmem>>, vector<256x128xf32>
    %c0_2 = arith.constant 0 : index
    %c0_3 = arith.constant 0 : index
    %4 = vector.load %arg2[%c0_2, %c0_3] : memref<256x256xbf16, #tpu.memory_space<vmem>>, vector<256x256xbf16>
    %c0_4 = arith.constant 0 : index
    %c0_5 = arith.constant 0 : index
    %5 = vector.load %arg3[%c0_4, %c0_5] : memref<256x128xbf16, #tpu.memory_space<vmem>>, vector<256x128xbf16>
    %cst = arith.constant dense<0.000000e+00> : vector<256x128xf32>
    %6 = tpu.matmul %4, %5, %cst {dimension_numbers = #tpu.dot_dimension_numbers<[1], [0], [0], [1], [0, 0, 1, 1], [], []>} : vector<256x256xbf16>, vector<256x128xbf16>, vector<256x128xf32> -> vector<256x128xf32>
    %7 = arith.addf %3, %6 : vector<256x128xf32>
    %c0_6 = arith.constant 0 : index
    %c0_7 = arith.constant 0 : index
    %8 = vector.load %arg6[%c0_6, %c0_7] : memref<256x128xf32, #tpu.memory_space<vmem>>, vector<256x128xf32>
    tpu.vector_store %arg6[%c0_6, %c0_7], %7 {strides = array<i32>} : memref<256x128xf32, #tpu.memory_space<vmem>>, vector<256x128xf32>,
    %c1_i32 = arith.constant 1 : i32
    %9 = arith.cmpi eq, %arg1, %c1_i32 : i32
    %10 = arith.extui %9 : i1 to i32
    %c0_i32_8 = arith.constant 0 : i32
    %11 = arith.cmpi ne, %10, %c0_i32_8 : i32
    scf.if %11 {
      %c0_9 = arith.constant 0 : index
      %c0_10 = arith.constant 0 : index
      %12 = vector.load %arg6[%c0_9, %c0_10] : memref<256x128xf32, #tpu.memory_space<vmem>>, vector<256x128xf32>
      %c0_11 = arith.constant 0 : index
      %c0_12 = arith.constant 0 : index
      %13 = vector.load %arg4[%c0_11, %c0_12] : memref<1x128xf32, #tpu.memory_space<vmem>>, vector<1x128xf32>
      %14 = vector.broadcast %13 : vector<1x128xf32> to vector<256x128xf32>
      %15 = arith.addf %12, %14 : vector<256x128xf32>
      %c0_13 = arith.constant 0 : index
      %c0_14 = arith.constant 0 : index
      %16 = vector.load %arg5[%c0_13, %c0_14] : memref<256x128xf32, #tpu.memory_space<vmem>>, vector<256x128xf32>
      tpu.vector_store %arg5[%c0_13, %c0_14], %15 {strides = array<i32>} : memref<256x128xf32, #tpu.memory_space<vmem>>, vector<256x128xf32>,
    } else {
    }
    return
  }
  func.func @transform_0(%arg0: i32, %arg1: i32) -> (i32, i32) {
    %c0_i32 = arith.constant 0 : i32
    return %arg0, %arg1 : i32, i32
  }
  func.func @transform_1(%arg0: i32, %arg1: i32) -> (i32, i32) {
    %c0_i32 = arith.constant 0 : i32
    %c0_i32_0 = arith.constant 0 : i32
    return %arg1, %c0_i32 : i32, i32
  }
  func.func @transform_2(%arg0: i32, %arg1: i32) -> (i32, i32) {
    %c0_i32 = arith.constant 0 : i32
    %c0_i32_0 = arith.constant 0 : i32
    %c0_i32_1 = arith.constant 0 : i32
    return %c0_i32, %c0_i32_0 : i32, i32
  }
  func.func @transform_3(%arg0: i32, %arg1: i32) -> (i32, i32) {
    %c0_i32 = arith.constant 0 : i32
    %c0_i32_0 = arith.constant 0 : i32
    return %arg0, %c0_i32 : i32, i32
  }
}

</mosaic_0001>

<llo_original>
// kernel: mul.66
$region0: #{mul.66}
  #allocation0 [shape = 's32[1]{0}', space=sflag, size = 0x4, scoped, tag = 'scoped memory for mul.66']
  %s0 = inlined_call_operand.vmem [shape: f32[600], index: 0, kind: input, shape index: {}]
  %s1 = inlined_call_operand.vmem [shape: f32[600], index: 1, kind: input, shape index: {}]
  %s2 = inlined_call_operand.vmem [shape: f32[600], index: 2, kind: output, shape index: {}]
  %v3 = vld [vmem:[%s0] sm:$0x1f]
  %v4 = vld [vmem:[%s1] sm:$0x1f]
  %5 = xla_tuple %v3, %v4
  %6 = xla_tuple %5
  %v7 = vmul.f32 %v3, %v4
  %8 = xla_tuple %v7
  %9 = vst [vmem:[%s2] sm:$0xff] %v7

// kernel: sag_gcn_forward.6
$region0: #{sag_gcn_forward.6}
  #allocation0 [shape = 'u32[]', space=smem, size = 0x4, offset = 0x4, fixed_abs, tag = 'smem constant byte address 0x4 - core index']
  #allocation1 [shape = 'u32[144,128]{1,0:T(1,128)}', space=vmem, size = 0x12000, scoped, tag = 'internal scratch']
  #allocation2 [shape = 'f32[256,128]{1,0:T(8,128)}', space=vmem, size = 0x20000, scoped, tag = 'scratch operand']
  %s0 = inlined_call_operand.vmem [shape: bf16[512,512], index: 0, kind: input, shape index: {}]
  %s1 = inlined_call_operand.vmem [shape: bf16[512,128], index: 1, kind: input, shape index: {}]
  %s2 = inlined_call_operand.vmem [shape: f32[1,128], index: 2, kind: input, shape index: {}]
  %s3 = inlined_call_operand.vmem [shape: f32[512,128], index: 3, kind: output, shape index: {}]
  %s4 = sld [smem:[#allocation0]]
  $region91: #{sag_gcn_forward.6} parent=0
    _
  %s6 = ssub.s32 1, %s4
  %s7 = scalar_select 0, %s6, %s4
  $region1: #{sag_gcn_forward.6} parent=0
    #allocation3 [shape = 'u8[262144]{0}', space=vmem, size = 0x40000, scoped, tag = 'input window, operand 0']
    loop: start=0, step=1, limit=6
    $region2: #{sag_gcn_forward.6} parent=1 // loop_pre_header
      _
    $region3: #{sag_gcn_forward.6} parent=1 // loop_header
      %s9 = sphi 0, %s13
      %p10 = scmp.ge.s32.totalorder %s9, 6
      %s16 = sphi 0, %s28
      %s17 = sphi 0, %s24
      %s18 = sphi 0, %s16
      %s19 = sphi 0, %s17
      %s20 = sphi 0, %s18
      %s21 = sphi 0, %s19
      %s33 = sphi 0, %s35
      %s36 = sphi 0, %s33
      %s37 = sphi 0, %s36
      %s53 = sphi 0, %s37
      %s59 = sphi 0, %s61
      %s62 = sphi 0, %s59
      %s63 = sphi 0, %s62
      %s79 = sphi 0, %s63
      %s83 = sphi 0, %s83
      %s85 = sphi 0, %s83
      %s86 = sphi 0, %s85
      %s100 = sphi 0, %s86
      %s106 = sphi 0, %s108
      %s109 = sphi 0, %s106
      %s110 = sphi 0, %s109
      %s126 = sphi 0, %s110
    $region4: #{sag_gcn_forward.6} parent=1 // loop_header_branch
      %12 = sbr.rel (%p10) target = $region8
    $region5: #{sag_gcn_forward.6} parent=1 // loop_body
      %s14 = ssub.s32 %s9, 1
      %s15 = ssub.s32 %s9, 2
      %s22 = sadd.s32 1, %s17
      %p23 = scmp.ge.s32.totalorder %s22, 2
      %s24 = scalar_select %p23, 0, %s22
      %s25 = sadd.s32 1, %s16
      %s26 = scalar_select %p23, %s25, %s16
      %p27 = scmp.ge.s32.totalorder %s26, 2
      %s28 = scalar_select %p27, 0, %s26
      %s29 = ssub.s32 %s16, %s28
      %s30 = ssub.s32 %s17, %s24
      %s31 = sor.u32 %s29, %s30
      %p32 = scmp.eq.s32.totalorder %s31, 0
      %s34 = sadd.s32 %s33, 1
      %s35 = scalar_select %p32, %s33, %s34
      %p38 = pneg %p32
      %p39 = scmp.eq.s32.totalorder %s9, 3
      %p40 = por %p38, %p39
      %p41 = scmp.ne.s32.totalorder %s33, %s36
      %p42 = scmp.eq.s32.totalorder %s9, 0
      %p43 = por %p41, %p42
      %p44 = scmp.ne.s32.totalorder %s33, %s36
      %p45 = scmp.eq.s32.totalorder %s14, 3
      %p46 = por %p44, %p45
      %p47 = scmp.ne.s32.totalorder %s36, %s37
      %p48 = scmp.eq.s32.totalorder %s14, 0
      %p49 = por %p47, %p48
      %p50 = scmp.ne.s32.totalorder %s36, %s37
      %p51 = scmp.eq.s32.totalorder %s15, 3
      %p52 = por %p50, %p51
      %p54 = scmp.ne.s32.totalorder %s37, %s53
      %p55 = scmp.eq.s32.totalorder %s15, 0
      %p56 = por %p54, %p55
      %s57 = ssub.s32 %s17, %s24
      %p58 = scmp.eq.s32.totalorder %s57, 0
      %s60 = sadd.s32 %s59, 1
      %s61 = scalar_select %p58, %s59, %s60
      %p64 = pneg %p58
      %p65 = scmp.eq.s32.totalorder %s9, 3
      %p66 = por %p64, %p65
      %p67 = scmp.ne.s32.totalorder %s59, %s62
      %p68 = scmp.eq.s32.totalorder %s9, 0
      %p69 = por %p67, %p68
      %p70 = scmp.ne.s32.totalorder %s59, %s62
      %p71 = scmp.eq.s32.totalorder %s14, 3
      %p72 = por %p70, %p71
      %p73 = scmp.ne.s32.totalorder %s62, %s63
      %p74 = scmp.eq.s32.totalorder %s14, 0
      %p75 = por %p73, %p74
      %p76 = scmp.ne.s32.totalorder %s62, %s63
      %p77 = scmp.eq.s32.totalorder %s15, 3
      %p78 = por %p76, %p77
      %p80 = scmp.ne.s32.totalorder %s63, %s79
      %p81 = scmp.eq.s32.totalorder %s15, 0
      %p82 = por %p80, %p81
      %s84 = sadd.s32 %s83, 1
      %p87 = scmp.eq.s32.totalorder %s9, 3
      %p88 = scmp.ne.s32.totalorder %s83, %s85
      %p89 = scmp.eq.s32.totalorder %s9, 0
      %p90 = por %p88, %p89
      %p91 = scmp.ne.s32.totalorder %s83, %s85
      %p92 = scmp.eq.s32.totalorder %s14, 3
      %p93 = por %p91, %p92
      %p94 = scmp.ne.s32.totalorder %s85, %s86
      %p95 = scmp.eq.s32.totalorder %s14, 0
      %p96 = por %p94, %p95
      %p97 = scmp.ne.s32.totalorder %s85, %s86
      %p98 = scmp.eq.s32.totalorder %s15, 3
      %p99 = por %p97, %p98
      %p101 = scmp.ne.s32.totalorder %s86, %s100
      %p102 = scmp.eq.s32.totalorder %s15, 0
      %p103 = por %p101, %p102
      %s104 = ssub.s32 %s16, %s28
      %p105 = scmp.eq.s32.totalorder %s104, 0
      %s107 = sadd.s32 %s106, 1
      %s108 = scalar_select %p105, %s106, %s107
      %p111 = pneg %p105
      %p112 = scmp.eq.s32.totalorder %s9, 3
      %p113 = por %p111, %p112
      %p114 = scmp.ne.s32.totalorder %s106, %s109
      %p115 = scmp.eq.s32.totalorder %s9, 0
      %p116 = por %p114, %p115
      %p117 = scmp.ne.s32.totalorder %s106, %s109
      %p118 = scmp.eq.s32.totalorder %s14, 3
      %p119 = por %p117, %p118
      %p120 = scmp.ne.s32.totalorder %s109, %s110
      %p121 = scmp.eq.s32.totalorder %s14, 0
      %p122 = por %p120, %p121
      %p123 = scmp.ne.s32.totalorder %s109, %s110
      %p124 = scmp.eq.s32.totalorder %s15, 3
      %p125 = por %p123, %p124
      %p127 = scmp.ne.s32.totalorder %s110, %s126
      %p128 = scmp.eq.s32.totalorder %s15, 0
      %p129 = por %p127, %p128
      %p130 = scmp.le.s32.totalorder 1, %s9
      %p131 = scmp.lt.s32.totalorder %s9, 5
      %p132 = pnand %p130, %p131
      %p133 = pneg %p132
      // Predicated region
      $region9: #{sag_gcn_forward.6} parent=5 // pred_check
        _
      $region10: #{sag_gcn_forward.6} parent=5 // pred_check_branch
        %135 = sbr.rel (%p132) target = $region12
      $region11: #{sag_gcn_forward.6} parent=5 // pred_region
        %s136 = ssub.s32 %s9, 1
        // Predicated region
        $region13: #{sag_gcn_forward.6} parent=11 // pred_check
          %p137 = pneg %p96
        $region14: #{sag_gcn_forward.6} parent=11 // pred_check_branch
          %139 = sbr.rel (%p137) target = $region16
        $region15: #{sag_gcn_forward.6} parent=11 // pred_region
          _
        $region16: #{sag_gcn_forward.6} parent=11 // pred_fallthru
          _
      $region12: #{sag_gcn_forward.6} parent=5 // pred_fallthru
        _
      %p140 = scmp.lt.s32.totalorder %s9, 4
      // Predicated region
      $region17: #{sag_gcn_forward.6} parent=5 // pred_check
        %p141 = pneg %p140
      $region18: #{sag_gcn_forward.6} parent=5 // pred_check_branch
        %143 = sbr.rel (%p141) target = $region20
      $region19: #{sag_gcn_forward.6} parent=5 // pred_region
        // Predicated region
        $region21: #{sag_gcn_forward.6} parent=19 // pred_check
          %p144 = pneg %p43
        $region22: #{sag_gcn_forward.6} parent=19 // pred_check_branch
          %146 = sbr.rel (%p144) target = $region24
        $region23: #{sag_gcn_forward.6} parent=19 // pred_region
          %s147 = sand.u32 %s33, 1
          %s148 = sand.u32 %s33, 1
          %s149 = smul.addr %s148, 256
          %s150 = scalar_lea.vmem [#allocation3], %s149
          %s151 = smul.u32 32, %s16
          %s152 = smul.u32 2, %s17
          %s153 = smul.addr %s151, 4
          %s154 = sadd.s32 %s152, %s153
          %s155 = smul.addr %s154, 4
          %s156 = scalar_lea.vmem %s0, %s155
          // Predicated region
          $region25: #{sag_gcn_forward.6} parent=23 // pred_check
            _
          $region26: #{sag_gcn_forward.6} parent=23 // pred_check_branch
            %158 = sbr.rel (0) target = $region28
          $region27: #{sag_gcn_forward.6} parent=23 // pred_region
            // Predicated region
            $region29: #{sag_gcn_forward.6} parent=27 // pred_check
              _
            $region30: #{sag_gcn_forward.6} parent=27 // pred_check_branch
              %160 = sbr.rel (0) target = $region32
            $region31: #{sag_gcn_forward.6} parent=27 // pred_region
              // Predicated region
              $region44: #{sag_gcn_forward.6} parent=31 // pred_check
                _
              $region45: #{sag_gcn_forward.6} parent=31 // pred_check_branch
                %238 = sbr.rel (0) target = $region47
              $region46: #{sag_gcn_forward.6} parent=31 // pred_region
                loop: start=0, step=1, limit=1
                $region48: #{sag_gcn_forward.6} parent=46 // loop_pre_header
                  _
                $region49: #{sag_gcn_forward.6} parent=46 // loop_header
                  %s240 = sphi 0, %s244
                  %p241 = scmp.ge.s32.totalorder %s240, 1
                  %s245 = sphi %s156, %s156
                  %s246 = sphi %s150, %s150
                $region50: #{sag_gcn_forward.6} parent=46 // loop_header_branch
                  %243 = sbr.rel (%p241) target = $region54
                $region51: #{sag_gcn_forward.6} parent=46 // loop_body
                  %v247 = vld [vmem:[%s245] sm:$0xff]
                  %248 = vst [vmem:[%s246] sm:$0xff] %v247
                  %v249 = vld [vmem:[%s245 + $0x10] sm:$0xff]
                  %250 = vst [vmem:[%s246 + $0x8] sm:$0xff] %v249
                  %v251 = vld [vmem:[%s245 + $0x20] sm:$0xff]
                  %252 = vst [vmem:[%s246 + $0x10] sm:$0xff] %v251
                  %v253 = vld [vmem:[%s245 + $0x30] sm:$0xff]
                  %254 = vst [vmem:[%s246 + $0x18] sm:$0xff] %v253
                  %v255 = vld [vmem:[%s245 + $0x40] sm:$0xff]
                  %256 = vst [vmem:[%s246 + $0x20] sm:$0xff] %v255
                  %v257 = vld [vmem:[%s245 + $0x50] sm:$0xff]
                  %258 = vst [vmem:[%s246 + $0x28] sm:$0xff] %v257
                  %v259 = vld [vmem:[%s245 + $0x60] sm:$0xff]
                  %260 = vst [vmem:[%s246 + $0x30] sm:$0xff] %v259
                  %v261 = vld [vmem:[%s245 + $0x70] sm:$0xff]
                  %262 = vst [vmem:[%s246 + $0x38] sm:$0xff] %v261
                  %v263 = vld [vmem:[%s245 + $0x80] sm:$0xff]
                  %264 = vst [vmem:[%s246 + $0x40] sm:$0xff] %v263
                  %v265 = vld [vmem:[%s245 + $0x90] sm:$0xff]
                  %266 = vst [vmem:[%s246 + $0x48] sm:$0xff] %v265
                  %v267 = vld [vmem:[%s245 + $0xa0] sm:$0xff]
                  %268 = vst [vmem:[%s246 + $0x50] sm:$0xff] %v267
                  %v269 = vld [vmem:[%s245 + $0xb0] sm:$0xff]
                  %270 = vst [vmem:[%s246 + $0x58] sm:$0xff] %v269
                  %v271 = vld [vmem:[%s245 + $0xc0] sm:$0xff]
                  %272 = vst [vmem:[%s246 + $0x60] sm:$0xff] %v271
                  %v273 = vld [vmem:[%s245 + $0xd0] sm:$0xff]
                  %274 = vst [vmem:[%s246 + $0x68] sm:$0xff] %v273
                  %v275 = vld [vmem:[%s245 + $0xe0] sm:$0xff]
                  %276 = vst [vmem:[%s246 + $0x70] sm:$0xff] %v275
                  %v277 = vld [vmem:[%s245 + $0xf0] sm:$0xff]
                  %278 = vst [vmem:[%s246 + $0x78] sm:$0xff] %v277
                  %v279 = vld [vmem:[%s245 + $0x100] sm:$0xff]
                  %280 = vst [vmem:[%s246 + $0x80] sm:$0xff] %v279
                  %v281 = vld [vmem:[%s245 + $0x110] sm:$0xff]
                  %282 = vst [vmem:[%s246 + $0x88] sm:$0xff] %v281
                  %v283 = vld [vmem:[%s245 + $0x120] sm:$0xff]
                  %284 = vst [vmem:[%s246 + $0x90] sm:$0xff] %v283
                  %v285 = vld [vmem:[%s245 + $0x130] sm:$0xff]
                  %286 = vst [vmem:[%s246 + $0x98] sm:$0xff] %v285
                  %v287 = vld [vmem:[%s245 + $0x140] sm:$0xff]
                  %288 = vst [vmem:[%s246 + $0xa0] sm:$0xff] %v287
                  %v289 = vld [vmem:[%s245 + $0x150] sm:$0xff]
                  %290 = vst [vmem:[%s246 + $0xa8] sm:$0xff] %v289
                  %v291 = vld [vmem:[%s245 + $0x160] sm:$0xff]
                  %292 = vst [vmem:[%s246 + $0xb0] sm:$0xff] %v291
                  %v293 = vld [vmem:[%s245 + $0x170] sm:$0xff]
                  %294 = vst [vmem:[%s246 + $0xb8] sm:$0xff] %v293
                  %v295 = vld [vmem:[%s245 + $0x180] sm:$0xff]
                  %296 = vst [vmem:[%s246 + $0xc0] sm:$0xff] %v295
                  %v297 = vld [vmem:[%s245 + $0x190] sm:$0xff]
                  %298 = vst [vmem:[%s246 + $0xc8] sm:$0xff] %v297
                  %v299 = vld [vmem:[%s245 + $0x1a0] sm:$0xff]
                  %300 = vst [vmem:[%s246 + $0xd0] sm:$0xff] %v299
                  %v301 = vld [vmem:[%s245 + $0x1b0] sm:$0xff]
                  %302 = vst [vmem:[%s246 + $0xd8] sm:$0xff] %v301
                  %v303 = vld [vmem:[%s245 + $0x1c0] sm:$0xff]
                  %304 = vst [vmem:[%s246 + $0xe0] sm:$0xff] %v303
                  %v305 = vld [vmem:[%s245 + $0x1d0] sm:$0xff]
                  %306 = vst [vmem:[%s246 + $0xe8] sm:$0xff] %v305
                  %v307 = vld [vmem:[%s245 + $0x1e0] sm:$0xff]
                  %308 = vst [vmem:[%s246 + $0xf0] sm:$0xff] %v307
                  %v309 = vld [vmem:[%s245 + $0x1f0] sm:$0xff]
                  %310 = vst [vmem:[%s246 + $0xf8] sm:$0xff] %v309
                $region52: #{sag_gcn_forward.6} parent=46 // loop_footer
                  %s244 = sadd.s32 1, %s240
                $region53: #{sag_gcn_forward.6} parent=46 // loop_footer_branch
                  %239 = sbr.rel target = $region49
                $region54: #{sag_gcn_forward.6} parent=46 // loop_exit
                  _
              $region47: #{sag_gcn_forward.6} parent=31 // pred_fallthru
                _
              // Predicated region
              $region55: #{sag_gcn_forward.6} parent=31 // pred_check
                _
              $region56: #{sag_gcn_forward.6} parent=31 // pred_check_branch
                %312 = sbr.rel target = $region58
              $region57: #{sag_gcn_forward.6} parent=31 // pred_region
                _
              $region58: #{sag_gcn_forward.6} parent=31 // pred_fallthru
                _
            $region32: #{sag_gcn_forward.6} parent=27 // pred_fallthru
              _
            // Predicated region
            $region33: #{sag_gcn_forward.6} parent=27 // pred_check
              _
            $region34: #{sag_gcn_forward.6} parent=27 // pred_check_branch
              %162 = sbr.rel target = $region36
            $region35: #{sag_gcn_forward.6} parent=27 // pred_region
              %s164 = ssub.s32 256, 1
              loop: start=0, step=1, limit=1
              $region37: #{sag_gcn_forward.6} parent=35 // loop_pre_header
                _
              $region38: #{sag_gcn_forward.6} parent=35 // loop_header
                %s166 = sphi 0, %s170
                %p167 = scmp.ge.s32.totalorder %s166, 1
                %s171 = sphi %s156, %s156
                %s172 = sphi %s150, %s150
              $region39: #{sag_gcn_forward.6} parent=35 // loop_header_branch
                %169 = sbr.rel (%p167) target = $region43
              $region40: #{sag_gcn_forward.6} parent=35 // loop_body
                %v173 = vld [vmem:[%s171] sm:%s164]
                %174 = vst [vmem:[%s172] sm:%s164] %v173
                %v175 = vld [vmem:[%s171 + $0x10] sm:%s164]
                %176 = vst [vmem:[%s172 + $0x8] sm:%s164] %v175
                %v177 = vld [vmem:[%s171 + $0x20] sm:%s164]
                %178 = vst [vmem:[%s172 + $0x10] sm:%s164] %v177
                %v179 = vld [vmem:[%s171 + $0x30] sm:%s164]
                %180 = vst [vmem:[%s172 + $0x18] sm:%s164] %v179
                %v181 = vld [vmem:[%s171 + $0x40] sm:%s164]
                %182 = vst [vmem:[%s172 + $0x20] sm:%s164] %v181
                %v183 = vld [vmem:[%s171 + $0x50] sm:%s164]
                %184 = vst [vmem:[%s172 + $0x28] sm:%s164] %v183
                %v185 = vld [vmem:[%s171 + $0x60] sm:%s164]
                %186 = vst [vmem:[%s172 + $0x30] sm:%s164] %v185
                %v187 = vld [vmem:[%s171 + $0x70] sm:%s164]
                %188 = vst [vmem:[%s172 + $0x38] sm:%s164] %v187
                %v189 = vld [vmem:[%s171 + $0x80] sm:%s164]
                %190 = vst [vmem:[%s172 + $0x40] sm:%s164] %v189
                %v191 = vld [vmem:[%s171 + $0x90] sm:%s164]
                %192 = vst [vmem:[%s172 + $0x48] sm:%s164] %v191
                %v193 = vld [vmem:[%s171 + $0xa0] sm:%s164]
                %194 = vst [vmem:[%s172 + $0x50] sm:%s164] %v193
                %v195 = vld [vmem:[%s171 + $0xb0] sm:%s164]
                %196 = vst [vmem:[%s172 + $0x58] sm:%s164] %v195
                %v197 = vld [vmem:[%s171 + $0xc0] sm:%s164]
                %198 = vst [vmem:[%s172 + $0x60] sm:%s164] %v197
                %v199 = vld [vmem:[%s171 + $0xd0] sm:%s164]
                %200 = vst [vmem:[%s172 + $0x68] sm:%s164] %v199
                %v201 = vld [vmem:[%s171 + $0xe0] sm:%s164]
                %202 = vst [vmem:[%s172 + $0x70] sm:%s164] %v201
                %v203 = vld [vmem:[%s171 + $0xf0] sm:%s164]
                %204 = vst [vmem:[%s172 + $0x78] sm:%s164] %v203
                %v205 = vld [vmem:[%s171 + $0x100] sm:%s164]
                %206 = vst [vmem:[%s172 + $0x80] sm:%s164] %v205
                %v207 = vld [vmem:[%s171 + $0x110] sm:%s164]
                %208 = vst [vmem:[%s172 + $0x88] sm:%s164] %v207
                %v209 = vld [vmem:[%s171 + $0x120] sm:%s164]
                %210 = vst [vmem:[%s172 + $0x90] sm:%s164] %v209
                %v211 = vld [vmem:[%s171 + $0x130] sm:%s164]
                %212 = vst [vmem:[%s172 + $0x98] sm:%s164] %v211
                %v213 = vld [vmem:[%s171 + $0x140] sm:%s164]
                %214 = vst [vmem:[%s172 + $0xa0] sm:%s164] %v213
                %v215 = vld [vmem:[%s171 + $0x150] sm:%s164]
                %216 = vst [vmem:[%s172 + $0xa8] sm:%s164] %v215
                %v217 = vld [vmem:[%s171 + $0x160] sm:%s164]
                %218 = vst [vmem:[%s172 + $0xb0] sm:%s164] %v217
                %v219 = vld [vmem:[%s171 + $0x170] sm:%s164]
                %220 = vst [vmem:[%s172 + $0xb8] sm:%s164] %v219
                %v221 = vld [vmem:[%s171 + $0x180] sm:%s164]
                %222 = vst [vmem:[%s172 + $0xc0] sm:%s164] %v221
                %v223 = vld [vmem:[%s171 + $0x190] sm:%s164]
                %224 = vst [vmem:[%s172 + $0xc8] sm:%s164] %v223
                %v225 = vld [vmem:[%s171 + $0x1a0] sm:%s164]
                %226 = vst [vmem:[%s172 + $0xd0] sm:%s164] %v225
                %v227 = vld [vmem:[%s171 + $0x1b0] sm:%s164]
                %228 = vst [vmem:[%s172 + $0xd8] sm:%s164] %v227
                %v229 = vld [vmem:[%s171 + $0x1c0] sm:%s164]
                %230 = vst [vmem:[%s172 + $0xe0] sm:%s164] %v229
                %v231 = vld [vmem:[%s171 + $0x1d0] sm:%s164]
                %232 = vst [vmem:[%s172 + $0xe8] sm:%s164] %v231
                %v233 = vld [vmem:[%s171 + $0x1e0] sm:%s164]
                %234 = vst [vmem:[%s172 + $0xf0] sm:%s164] %v233
                %v235 = vld [vmem:[%s171 + $0x1f0] sm:%s164]
                %236 = vst [vmem:[%s172 + $0xf8] sm:%s164] %v235
              $region41: #{sag_gcn_forward.6} parent=35 // loop_footer
                %s170 = sadd.s32 1, %s166
              $region42: #{sag_gcn_forward.6} parent=35 // loop_footer_branch
                %165 = sbr.rel target = $region38
              $region43: #{sag_gcn_forward.6} parent=35 // loop_exit
                _
            $region36: #{sag_gcn_forward.6} parent=27 // pred_fallthru
              _
          $region28: #{sag_gcn_forward.6} parent=23 // pred_fallthru
            _
          %313 = vnop
        $region24: #{sag_gcn_forward.6} parent=19 // pred_fallthru
          _
        // Predicated region
        $region59: #{sag_gcn_forward.6} parent=19 // pred_check
          %p314 = pneg %p69
        $region60: #{sag_gcn_forward.6} parent=19 // pred_check_branch
          %316 = sbr.rel (%p314) target = $region62
        $region61: #{sag_gcn_forward.6} parent=19 // pred_region
          %s317 = smul.u32 32, %s17
          %p318 = scmp.lt.s32.totalorder %s317, 63
          %s319 = scalar_select %p318, %s317, 63
          %s320 = smul.addr %s319, 4
          %s321 = scalar_lea.vmem %s1, %s320
          %s322 = smul.u32 32, %s17
        $region62: #{sag_gcn_forward.6} parent=19 // pred_fallthru
          _
      $region20: #{sag_gcn_forward.6} parent=5 // pred_fallthru
        _
      %p323 = scmp.le.s32.totalorder 1, %s9
      %p324 = scmp.lt.s32.totalorder %s9, 5
      %p325 = pnand %p323, %p324
      %p326 = pneg %p325
      // Predicated region
      $region63: #{sag_gcn_forward.6} parent=5 // pred_check
        _
      $region64: #{sag_gcn_forward.6} parent=5 // pred_check_branch
        %328 = sbr.rel (%p325) target = $region66
      $region65: #{sag_gcn_forward.6} parent=5 // pred_region
        %s329 = ssub.s32 %s9, 1
        %s330 = sand.u32 %s36, 1
        %s331 = sand.u32 %s36, 1
        %s332 = smul.addr %s331, 256
        %s333 = scalar_lea.vmem [#allocation3], %s332
        // Predicated region
        $region67: #{sag_gcn_forward.6} parent=65 // pred_check
          %p334 = pneg %p49
        $region68: #{sag_gcn_forward.6} parent=65 // pred_check_branch
          %336 = sbr.rel (%p334) target = $region70
        $region69: #{sag_gcn_forward.6} parent=65 // pred_region
          _
        $region70: #{sag_gcn_forward.6} parent=65 // pred_fallthru
          _
        %s337 = sand.u32 %s36, 1
        %s338 = sand.u32 %s36, 1
        %s339 = smul.addr %s338, 256
        %s340 = scalar_lea.vmem [#allocation3], %s339
        %p341 = pneg %p49
        %p342 = pneg %p46
        %s343 = smul.u32 32, %s19
        %p344 = scmp.lt.s32.totalorder %s343, 63
        %s345 = scalar_select %p344, %s343, 63
        %s346 = smul.addr %s345, 4
        %s347 = scalar_lea.vmem %s1, %s346
        %p348 = pneg %p75
        %p349 = pneg %p72
        %p350 = pneg %p96
        %p351 = pneg %p93
        %p352 = pneg %p122
        %p353 = pneg %p119
        %s354 = smul.u32 32, %s18
        %p355 = scmp.lt.s32.totalorder %s354, 63
        %s356 = scalar_select %p355, %s354, 63
        %s357 = smul.addr %s356, 8
        %s358 = scalar_lea.vmem %s3, %s357
        %s359 = smul.u32 32, %s18
        %s360 = smul.u32 2, %s19
        %s361 = smul.u32 32, %s19
        %p362 = scmp.lt.s32.totalorder %s361, 63
        %s363 = scalar_select %p362, %s361, 63
        %s364 = smul.addr %s363, 4
        %s365 = scalar_lea.vmem %s1, %s364
        %s366 = smul.u32 32, %s19
        %s367 = smul.u32 32, %s18
        %p368 = scmp.lt.s32.totalorder %s367, 63
        %s369 = scalar_select %p368, %s367, 63
        %s370 = smul.addr %s369, 8
        %s371 = scalar_lea.vmem %s3, %s370
        %s372 = smul.u32 32, %s18
        %p374 = scmp.eq.s32.totalorder %s19, 0
        // Predicated region
        $region71: #{sag_gcn_forward.6} parent=65 // pred_check
          %p375 = pneg %p374
        $region72: #{sag_gcn_forward.6} parent=65 // pred_check_branch
          %377 = sbr.rel (%p375) target = $region74
        $region73: #{sag_gcn_forward.6} parent=65 // pred_region
          %378 = vst [vmem:[#allocation2] sm:$0xff] 0.0
          %379 = vst [vmem:[#allocation2 + $0x8] sm:$0xff] 0.0
          %380 = vst [vmem:[#allocation2 + $0x10] sm:$0xff] 0.0
          %381 = vst [vmem:[#allocation2 + $0x18] sm:$0xff] 0.0
          %382 = vst [vmem:[#allocation2 + $0x20] sm:$0xff] 0.0
          %383 = vst [vmem:[#allocation2 + $0x28] sm:$0xff] 0.0
          %384 = vst [vmem:[#allocation2 + $0x30] sm:$0xff] 0.0
          %385 = vst [vmem:[#allocation2 + $0x38] sm:$0xff] 0.0
          %386 = vst [vmem:[#allocation2 + $0x40] sm:$0xff] 0.0
          %387 = vst [vmem:[#allocation2 + $0x48] sm:$0xff] 0.0
          %388 = vst [vmem:[#allocation2 + $0x50] sm:$0xff] 0.0
          %389 = vst [vmem:[#allocation2 + $0x58] sm:$0xff] 0.0
          %390 = vst [vmem:[#allocation2 + $0x60] sm:$0xff] 0.0
          %391 = vst [vmem:[#allocation2 + $0x68] sm:$0xff] 0.0
          %392 = vst [vmem:[#allocation2 + $0x70] sm:$0xff] 0.0
          %393 = vst [vmem:[#allocation2 + $0x78] sm:$0xff] 0.0
          %394 = vst [vmem:[#allocation2 + $0x80] sm:$0xff] 0.0
          %395 = vst [vmem:[#allocation2 + $0x88] sm:$0xff] 0.0
          %396 = vst [vmem:[#allocation2 + $0x90] sm:$0xff] 0.0
          %397 = vst [vmem:[#allocation2 + $0x98] sm:$0xff] 0.0
          %398 = vst [vmem:[#allocation2 + $0xa0] sm:$0xff] 0.0
          %399 = vst [vmem:[#allocation2 + $0xa8] sm:$0xff] 0.0
          %400 = vst [vmem:[#allocation2 + $0xb0] sm:$0xff] 0.0
          %401 = vst [vmem:[#allocation2 + $0xb8] sm:$0xff] 0.0
          %402 = vst [vmem:[#allocation2 + $0xc0] sm:$0xff] 0.0
          %403 = vst [vmem:[#allocation2 + $0xc8] sm:$0xff] 0.0
          %404 = vst [vmem:[#allocation2 + $0xd0] sm:$0xff] 0.0
          %405 = vst [vmem:[#allocation2 + $0xd8] sm:$0xff] 0.0
          %406 = vst [vmem:[#allocation2 + $0xe0] sm:$0xff] 0.0
          %407 = vst [vmem:[#allocation2 + $0xe8] sm:$0xff] 0.0
          %408 = vst [vmem:[#allocation2 + $0xf0] sm:$0xff] 0.0
          %409 = vst [vmem:[#allocation2 + $0xf8] sm:$0xff] 0.0
        $region74: #{sag_gcn_forward.6} parent=65 // pred_fallthru
          _
        %v410 = vld [vmem:[#allocation2] sm:$0xff]
        %v411 = vld [vmem:[#allocation2 + $0x8] sm:$0xff]
        %v412 = vld [vmem:[#allocation2 + $0x10] sm:$0xff]
        %v413 = vld [vmem:[#allocation2 + $0x18] sm:$0xff]
        %v414 = vld [vmem:[#allocation2 + $0x20] sm:$0xff]
        %v415 = vld [vmem:[#allocation2 + $0x28] sm:$0xff]
        %v416 = vld [vmem:[#allocation2 + $0x30] sm:$0xff]
        %v417 = vld [vmem:[#allocation2 + $0x38] sm:$0xff]
        %v418 = vld [vmem:[#allocation2 + $0x40] sm:$0xff]
        %v419 = vld [vmem:[#allocation2 + $0x48] sm:$0xff]
        %v420 = vld [vmem:[#allocation2 + $0x50] sm:$0xff]
        %v421 = vld [vmem:[#allocation2 + $0x58] sm:$0xff]
        %v422 = vld [vmem:[#allocation2 + $0x60] sm:$0xff]
        %v423 = vld [vmem:[#allocation2 + $0x68] sm:$0xff]
        %v424 = vld [vmem:[#allocation2 + $0x70] sm:$0xff]
        %v425 = vld [vmem:[#allocation2 + $0x78] sm:$0xff]
        %v426 = vld [vmem:[#allocation2 + $0x80] sm:$0xff]
        %v427 = vld [vmem:[#allocation2 + $0x88] sm:$0xff]
        %v428 = vld [vmem:[#allocation2 + $0x90] sm:$0xff]
        %v429 = vld [vmem:[#allocation2 + $0x98] sm:$0xff]
        %v430 = vld [vmem:[#allocation2 + $0xa0] sm:$0xff]
        %v431 = vld [vmem:[#allocation2 + $0xa8] sm:$0xff]
        %v432 = vld [vmem:[#allocation2 + $0xb0] sm:$0xff]
        %v433 = vld [vmem:[#allocation2 + $0xb8] sm:$0xff]
        %v434 = vld [vmem:[#allocation2 + $0xc0] sm:$0xff]
        %v435 = vld [vmem:[#allocation2 + $0xc8] sm:$0xff]
        %v436 = vld [vmem:[#allocation2 + $0xd0] sm:$0xff]
        %v437 = vld [vmem:[#allocation2 + $0xd8] sm:$0xff]
        %v438 = vld [vmem:[#allocation2 + $0xe0] sm:$0xff]
        %v439 = vld [vmem:[#allocation2 + $0xe8] sm:$0xff]
        %v440 = vld [vmem:[#allocation2 + $0xf0] sm:$0xff]
        %v441 = vld [vmem:[#allocation2 + $0xf8] sm:$0xff]
        %v442 = vld [vmem:[%s333] sm:$0xff]
        %v443 = vld [vmem:[%s333 + $0x8] sm:$0xff]
        %v444 = vld [vmem:[%s333 + $0x10] sm:$0xff]
        %v445 = vld [vmem:[%s333 + $0x18] sm:$0xff]
        %v446 = vld [vmem:[%s333 + $0x20] sm:$0xff]
        %v447 = vld [vmem:[%s333 + $0x28] sm:$0xff]
        %v448 = vld [vmem:[%s333 + $0x30] sm:$0xff]
        %v449 = vld [vmem:[%s333 + $0x38] sm:$0xff]
        %v450 = vld [vmem:[%s333 + $0x40] sm:$0xff]
        %v451 = vld [vmem:[%s333 + $0x48] sm:$0xff]
        %v452 = vld [vmem:[%s333 + $0x50] sm:$0xff]
        %v453 = vld [vmem:[%s333 + $0x58] sm:$0xff]
        %v454 = vld [vmem:[%s333 + $0x60] sm:$0xff]
        %v455 = vld [vmem:[%s333 + $0x68] sm:$0xff]
        %v456 = vld [vmem:[%s333 + $0x70] sm:$0xff]
        %v457 = vld [vmem:[%s333 + $0x78] sm:$0xff]
        %v458 = vld [vmem:[%s333 + $0x80] sm:$0xff]
        %v459 = vld [vmem:[%s333 + $0x88] sm:$0xff]
        %v460 = vld [vmem:[%s333 + $0x90] sm:$0xff]
        %v461 = vld [vmem:[%s333 + $0x98] sm:$0xff]
        %v462 = vld [vmem:[%s333 + $0xa0] sm:$0xff]
        %v463 = vld [vmem:[%s333 + $0xa8] sm:$0xff]
        %v464 = vld [vmem:[%s333 + $0xb0] sm:$0xff]
        %v465 = vld [vmem:[%s333 + $0xb8] sm:$0xff]
        %v466 = vld [vmem:[%s333 + $0xc0] sm:$0xff]
        %v467 = vld [vmem:[%s333 + $0xc8] sm:$0xff]
        %v468 = vld [vmem:[%s333 + $0xd0] sm:$0xff]
        %v469 = vld [vmem:[%s333 + $0xd8] sm:$0xff]
        %v470 = vld [vmem:[%s333 + $0xe0] sm:$0xff]
        %v471 = vld [vmem:[%s333 + $0xe8] sm:$0xff]
        %v472 = vld [vmem:[%s333 + $0xf0] sm:$0xff]
        %v473 = vld [vmem:[%s333 + $0xf8] sm:$0xff]
        %v474 = vld [vmem:[%s365] sm:$0xf]
        %v475 = vld [vmem:[%s365 + $0x4] sm:$0xf]
        %v476 = vld [vmem:[%s365 + $0x8] sm:$0xf]
        %v477 = vld [vmem:[%s365 + $0xc] sm:$0xf]
        %v478 = vld [vmem:[%s365 + $0x10] sm:$0xf]
        %v479 = vld [vmem:[%s365 + $0x14] sm:$0xf]
        %v480 = vld [vmem:[%s365 + $0x18] sm:$0xf]
        %v481 = vld [vmem:[%s365 + $0x1c] sm:$0xf]
        %v482 = vld [vmem:[%s365 + $0x20] sm:$0xf]
        %v483 = vld [vmem:[%s365 + $0x24] sm:$0xf]
        %v484 = vld [vmem:[%s365 + $0x28] sm:$0xf]
        %v485 = vld [vmem:[%s365 + $0x2c] sm:$0xf]
        %v486 = vld [vmem:[%s365 + $0x30] sm:$0xf]
        %v487 = vld [vmem:[%s365 + $0x34] sm:$0xf]
        %v488 = vld [vmem:[%s365 + $0x38] sm:$0xf]
        %v489 = vld [vmem:[%s365 + $0x3c] sm:$0xf]
        %v490 = vld [vmem:[%s365 + $0x40] sm:$0xf]
        %v491 = vld [vmem:[%s365 + $0x44] sm:$0xf]
        %v492 = vld [vmem:[%s365 + $0x48] sm:$0xf]
        %v493 = vld [vmem:[%s365 + $0x4c] sm:$0xf]
        %v494 = vld [vmem:[%s365 + $0x50] sm:$0xf]
        %v495 = vld [vmem:[%s365 + $0x54] sm:$0xf]
        %v496 = vld [vmem:[%s365 + $0x58] sm:$0xf]
        %v497 = vld [vmem:[%s365 + $0x5c] sm:$0xf]
        %v498 = vld [vmem:[%s365 + $0x60] sm:$0xf]
        %v499 = vld [vmem:[%s365 + $0x64] sm:$0xf]
        %v500 = vld [vmem:[%s365 + $0x68] sm:$0xf]
        %v501 = vld [vmem:[%s365 + $0x6c] sm:$0xf]
        %v502 = vld [vmem:[%s365 + $0x70] sm:$0xf]
        %v503 = vld [vmem:[%s365 + $0x74] sm:$0xf]
        %v504 = vld [vmem:[%s365 + $0x78] sm:$0xf]
        %v505 = vld [vmem:[%s365 + $0x7c] sm:$0xf]
        %v538 = vunpack.c.l.b16 %v442
        %v539 = vunpack.c.h.b16 %v442
        %v540 = vunpack.c.l.b16 %v443
        %v541 = vunpack.c.h.b16 %v443
        %v542 = vunpack.c.l.b16 %v444
        %v543 = vunpack.c.h.b16 %v444
        %v544 = vunpack.c.l.b16 %v445
        %v545 = vunpack.c.h.b16 %v445
        %v546 = vunpack.c.l.b16 %v446
        %v547 = vunpack.c.h.b16 %v446
        %v548 = vunpack.c.l.b16 %v447
        %v549 = vunpack.c.h.b16 %v447
        %v550 = vunpack.c.l.b16 %v448
        %v551 = vunpack.c.h.b16 %v448
        %v552 = vunpack.c.l.b16 %v449
        %v553 = vunpack.c.h.b16 %v449
        %v554 = vunpack.c.l.b16 %v450
        %v555 = vunpack.c.h.b16 %v450
        %v556 = vunpack.c.l.b16 %v451
        %v557 = vunpack.c.h.b16 %v451
        %v558 = vunpack.c.l.b16 %v452
        %v559 = vunpack.c.h.b16 %v452
        %v560 = vunpack.c.l.b16 %v453
        %v561 = vunpack.c.h.b16 %v453
        %v562 = vunpack.c.l.b16 %v454
        %v563 = vunpack.c.h.b16 %v454
        %v564 = vunpack.c.l.b16 %v455
        %v565 = vunpack.c.h.b16 %v455
        %v566 = vunpack.c.l.b16 %v456
        %v567 = vunpack.c.h.b16 %v456
        %v568 = vunpack.c.l.b16 %v457
        %v569 = vunpack.c.h.b16 %v457
        %v570 = vunpack.c.l.b16 %v458
        %v571 = vunpack.c.h.b16 %v458
        %v572 = vunpack.c.l.b16 %v459
        %v573 = vunpack.c.h.b16 %v459
        %v574 = vunpack.c.l.b16 %v460
        %v575 = vunpack.c.h.b16 %v460
        %v576 = vunpack.c.l.b16 %v461
        %v577 = vunpack.c.h.b16 %v461
        %v578 = vunpack.c.l.b16 %v462
        %v579 = vunpack.c.h.b16 %v462
        %v580 = vunpack.c.l.b16 %v463
        %v581 = vunpack.c.h.b16 %v463
        %v582 = vunpack.c.l.b16 %v464
        %v583 = vunpack.c.h.b16 %v464
        %v584 = vunpack.c.l.b16 %v465
        %v585 = vunpack.c.h.b16 %v465
        %v586 = vunpack.c.l.b16 %v466
        %v587 = vunpack.c.h.b16 %v466
        %v588 = vunpack.c.l.b16 %v467
        %v589 = vunpack.c.h.b16 %v467
        %v590 = vunpack.c.l.b16 %v468
        %v591 = vunpack.c.h.b16 %v468
        %v592 = vunpack.c.l.b16 %v469
        %v593 = vunpack.c.h.b16 %v469
        %v594 = vunpack.c.l.b16 %v470
        %v595 = vunpack.c.h.b16 %v470
        %v596 = vunpack.c.l.b16 %v471
        %v597 = vunpack.c.h.b16 %v471
        %v598 = vunpack.c.l.b16 %v472
        %v599 = vunpack.c.h.b16 %v472
        %v600 = vunpack.c.l.b16 %v473
        %v601 = vunpack.c.h.b16 %v473
        %v602 = vpack.c.b16 %v540, %v538
        %v603 = vpack.c.b16 %v541, %v539
        %v604 = vpack.c.b16 %v544, %v542
        %v605 = vpack.c.b16 %v545, %v543
        %v606 = vpack.c.b16 %v548, %v546
        %v607 = vpack.c.b16 %v549, %v547
        %v608 = vpack.c.b16 %v552, %v550
        %v609 = vpack.c.b16 %v553, %v551
        %v610 = vpack.c.b16 %v556, %v554
        %v611 = vpack.c.b16 %v557, %v555
        %v612 = vpack.c.b16 %v560, %v558
        %v613 = vpack.c.b16 %v561, %v559
        %v614 = vpack.c.b16 %v564, %v562
        %v615 = vpack.c.b16 %v565, %v563
        %v616 = vpack.c.b16 %v568, %v566
        %v617 = vpack.c.b16 %v569, %v567
        %v618 = vpack.c.b16 %v572, %v570
        %v619 = vpack.c.b16 %v573, %v571
        %v620 = vpack.c.b16 %v576, %v574
        %v621 = vpack.c.b16 %v577, %v575
        %v622 = vpack.c.b16 %v580, %v578
        %v623 = vpack.c.b16 %v581, %v579
        %v624 = vpack.c.b16 %v584, %v582
        %v625 = vpack.c.b16 %v585, %v583
        %v626 = vpack.c.b16 %v588, %v586
        %v627 = vpack.c.b16 %v589, %v587
        %v628 = vpack.c.b16 %v592, %v590
        %v629 = vpack.c.b16 %v593, %v591
        %v630 = vpack.c.b16 %v596, %v594
        %v631 = vpack.c.b16 %v597, %v595
        %v632 = vpack.c.b16 %v600, %v598
        %v633 = vpack.c.b16 %v601, %v599
        %v698 = vunpack.c.l.b16 %v474
        %v699 = vunpack.c.l.b16 %v475
        %v700 = vunpack.c.l.b16 %v476
        %v701 = vunpack.c.l.b16 %v477
        %v702 = vunpack.c.l.b16 %v478
        %v703 = vunpack.c.l.b16 %v479
        %v704 = vunpack.c.l.b16 %v480
        %v705 = vunpack.c.l.b16 %v481
        %v706 = vunpack.c.l.b16 %v482
        %v707 = vunpack.c.l.b16 %v483
        %v708 = vunpack.c.l.b16 %v484
        %v709 = vunpack.c.l.b16 %v485
        %v710 = vunpack.c.l.b16 %v486
        %v711 = vunpack.c.l.b16 %v487
        %v712 = vunpack.c.l.b16 %v488
        %v713 = vunpack.c.l.b16 %v489
        %v714 = vunpack.c.l.b16 %v490
        %v715 = vunpack.c.l.b16 %v491
        %v716 = vunpack.c.l.b16 %v492
        %v717 = vunpack.c.l.b16 %v493
        %v718 = vunpack.c.l.b16 %v494
        %v719 = vunpack.c.l.b16 %v495
        %v720 = vunpack.c.l.b16 %v496
        %v721 = vunpack.c.l.b16 %v497
        %v722 = vunpack.c.l.b16 %v498
        %v723 = vunpack.c.l.b16 %v499
        %v724 = vunpack.c.l.b16 %v500
        %v725 = vunpack.c.l.b16 %v501
        %v726 = vunpack.c.l.b16 %v502
        %v727 = vunpack.c.l.b16 %v503
        %v728 = vunpack.c.l.b16 %v504
        %v729 = vunpack.c.l.b16 %v505
        %v730 = vpack.c.b16 %v699, %v698
        %v731 = vpack.c.b16 %v701, %v700
        %v732 = vpack.c.b16 %v703, %v702
        %v733 = vpack.c.b16 %v705, %v704
        %v734 = vpack.c.b16 %v707, %v706
        %v735 = vpack.c.b16 %v709, %v708
        %v736 = vpack.c.b16 %v711, %v710
        %v737 = vpack.c.b16 %v713, %v712
        %v738 = vpack.c.b16 %v715, %v714
        %v739 = vpack.c.b16 %v717, %v716
        %v740 = vpack.c.b16 %v719, %v718
        %v741 = vpack.c.b16 %v721, %v720
        %v742 = vpack.c.b16 %v723, %v722
        %v743 = vpack.c.b16 %v725, %v724
        %v744 = vpack.c.b16 %v727, %v726
        %v745 = vpack.c.b16 %v729, %v728
        %762 = vmatprep.subr.bf16.mxu0 0
        %763 = vmatpush1.bf16.msra.mxu0 %v737
        %764 = vmatprep.subr.bf16.mxu0 0
        %765 = vmatpush1.bf16.msra.mxu0 %v736
        %766 = vmatprep.subr.bf16.mxu0 0
        %767 = vmatpush1.bf16.msra.mxu0 %v735
        %768 = vmatprep.subr.bf16.mxu0 0
        %769 = vmatpush1.bf16.msra.mxu0 %v734
        %770 = vmatprep.subr.bf16.mxu0 0
        %771 = vmatpush1.bf16.msra.mxu0 %v733
        %772 = vmatprep.subr.bf16.mxu0 0
        %773 = vmatpush1.bf16.msra.mxu0 %v732
        %774 = vmatprep.subr.bf16.mxu0 0
        %775 = vmatpush1.bf16.msra.mxu0 %v731
        %776 = vmatprep.subr.bf16.mxu0 0
        %777 = vmatpush1.bf16.msra.mxu0 %v730
        %778 = vmatprep.subr.bf16.mxu0 0
        %779 = vmatpush2.bf16.msra.mxu0 %v745
        %780 = vmatprep.subr.bf16.mxu0 0
        %781 = vmatpush2.bf16.msra.mxu0 %v744
        %782 = vmatprep.subr.bf16.mxu0 0
        %783 = vmatpush2.bf16.msra.mxu0 %v743
        %784 = vmatprep.subr.bf16.mxu0 0
        %785 = vmatpush2.bf16.msra.mxu0 %v742
        %786 = vmatprep.subr.bf16.mxu0 0
        %787 = vmatpush2.bf16.msra.mxu0 %v741
        %788 = vmatprep.subr.bf16.mxu0 0
        %789 = vmatpush2.bf16.msra.mxu0 %v740
        %790 = vmatprep.subr.bf16.mxu0 0
        %791 = vmatpush2.bf16.msra.mxu0 %v739
        %792 = vmatprep.subr.bf16.mxu0 0
        %793 = vmatpush2.bf16.msra.mxu0 %v738
        %794 = vmatprep.mubr.bf16.mxu0 %v603
        %795 = vmatmul.mubr.bf16.gmra.mxu0 %v602
        %v796 = vpop.f32.mrf.mxu0
        %v797 = vadd.f32 0.0, %v796
        %v798 = vpop.f32.mrf.mxu0
        %v799 = vpop.f32.mrf.mxu0
        %v800 = vadd.f32 0.0, %v799
        %v801 = vpop.f32.mrf.mxu0
        %802 = vmatprep.mubr.bf16.mxu0 %v605
        %803 = vmatmul.mubr.bf16.gmra.mxu0 %v604
        %v804 = vpop.f32.mrf.mxu0
        %v805 = vadd.f32 0.0, %v804
        %v806 = vpop.f32.mrf.mxu0
        %v807 = vpop.f32.mrf.mxu0
        %v808 = vadd.f32 0.0, %v807
        %v809 = vpop.f32.mrf.mxu0
        %810 = vmatprep.mubr.bf16.mxu0 %v607
        %811 = vmatmul.mubr.bf16.gmra.mxu0 %v606
        %v812 = vpop.f32.mrf.mxu0
        %v813 = vadd.f32 0.0, %v812
        %v814 = vpop.f32.mrf.mxu0
        %v815 = vpop.f32.mrf.mxu0
        %v816 = vadd.f32 0.0, %v815
        %v817 = vpop.f32.mrf.mxu0
        %818 = vmatprep.mubr.bf16.mxu0 %v609
        %819 = vmatmul.mubr.bf16.gmra.mxu0 %v608
        %v820 = vpop.f32.mrf.mxu0
        %v821 = vadd.f32 0.0, %v820
        %v822 = vpop.f32.mrf.mxu0
        %v823 = vpop.f32.mrf.mxu0
        %v824 = vadd.f32 0.0, %v823
        %v825 = vpop.f32.mrf.mxu0
        %826 = vmatprep.mubr.bf16.mxu0 %v611
        %827 = vmatmul.mubr.bf16.gmra.mxu0 %v610
        %v828 = vpop.f32.mrf.mxu0
        %v829 = vadd.f32 0.0, %v828
        %v830 = vpop.f32.mrf.mxu0
        %v831 = vpop.f32.mrf.mxu0
        %v832 = vadd.f32 0.0, %v831
        %v833 = vpop.f32.mrf.mxu0
        %834 = vmatprep.mubr.bf16.mxu0 %v613
        %835 = vmatmul.mubr.bf16.gmra.mxu0 %v612
        %v836 = vpop.f32.mrf.mxu0
        %v837 = vadd.f32 0.0, %v836
        %v838 = vpop.f32.mrf.mxu0
        %v839 = vpop.f32.mrf.mxu0
        %v840 = vadd.f32 0.0, %v839
        %v841 = vpop.f32.mrf.mxu0
        %842 = vmatprep.mubr.bf16.mxu0 %v615
        %843 = vmatmul.mubr.bf16.gmra.mxu0 %v614
        %v844 = vpop.f32.mrf.mxu0
        %v845 = vadd.f32 0.0, %v844
        %v846 = vpop.f32.mrf.mxu0
        %v847 = vpop.f32.mrf.mxu0
        %v848 = vadd.f32 0.0, %v847
        %v849 = vpop.f32.mrf.mxu0
        %850 = vmatprep.mubr.bf16.mxu0 %v617
        %851 = vmatmul.mubr.bf16.gmra.mxu0 %v616
        %v852 = vpop.f32.mrf.mxu0
        %v853 = vadd.f32 0.0, %v852
        %v854 = vpop.f32.mrf.mxu0
        %v855 = vpop.f32.mrf.mxu0
        %v856 = vadd.f32 0.0, %v855
        %v857 = vpop.f32.mrf.mxu0
        %858 = vmatprep.mubr.bf16.mxu0 %v619
        %859 = vmatmul.mubr.bf16.gmra.mxu0 %v618
        %v860 = vpop.f32.mrf.mxu0
        %v861 = vadd.f32 0.0, %v860
        %v862 = vpop.f32.mrf.mxu0
        %v863 = vpop.f32.mrf.mxu0
        %v864 = vadd.f32 0.0, %v863
        %v865 = vpop.f32.mrf.mxu0
        %866 = vmatprep.mubr.bf16.mxu0 %v621
        %867 = vmatmul.mubr.bf16.gmra.mxu0 %v620
        %v868 = vpop.f32.mrf.mxu0
        %v869 = vadd.f32 0.0, %v868
        %v870 = vpop.f32.mrf.mxu0
        %v871 = vpop.f32.mrf.mxu0
        %v872 = vadd.f32 0.0, %v871
        %v873 = vpop.f32.mrf.mxu0
        %874 = vmatprep.mubr.bf16.mxu0 %v623
        %875 = vmatmul.mubr.bf16.gmra.mxu0 %v622
        %v876 = vpop.f32.mrf.mxu0
        %v877 = vadd.f32 0.0, %v876
        %v878 = vpop.f32.mrf.mxu0
        %v879 = vpop.f32.mrf.mxu0
        %v880 = vadd.f32 0.0, %v879
        %v881 = vpop.f32.mrf.mxu0
        %882 = vmatprep.mubr.bf16.mxu0 %v625
        %883 = vmatmul.mubr.bf16.gmra.mxu0 %v624
        %v884 = vpop.f32.mrf.mxu0
        %v885 = vadd.f32 0.0, %v884
        %v886 = vpop.f32.mrf.mxu0
        %v887 = vpop.f32.mrf.mxu0
        %v888 = vadd.f32 0.0, %v887
        %v889 = vpop.f32.mrf.mxu0
        %890 = vmatprep.mubr.bf16.mxu0 %v627
        %891 = vmatmul.mubr.bf16.gmra.mxu0 %v626
        %v892 = vpop.f32.mrf.mxu0
        %v893 = vadd.f32 0.0, %v892
        %v894 = vpop.f32.mrf.mxu0
        %v895 = vpop.f32.mrf.mxu0
        %v896 = vadd.f32 0.0, %v895
        %v897 = vpop.f32.mrf.mxu0
        %898 = vmatprep.mubr.bf16.mxu0 %v629
        %899 = vmatmul.mubr.bf16.gmra.mxu0 %v628
        %v900 = vpop.f32.mrf.mxu0
        %v901 = vadd.f32 0.0, %v900
        %v902 = vpop.f32.mrf.mxu0
        %v903 = vpop.f32.mrf.mxu0
        %v904 = vadd.f32 0.0, %v903
        %v905 = vpop.f32.mrf.mxu0
        %906 = vmatprep.mubr.bf16.mxu0 %v631
        %907 = vmatmul.mubr.bf16.gmra.mxu0 %v630
        %v908 = vpop.f32.mrf.mxu0
        %v909 = vadd.f32 0.0, %v908
        %v910 = vpop.f32.mrf.mxu0
        %v911 = vpop.f32.mrf.mxu0
        %v912 = vadd.f32 0.0, %v911
        %v913 = vpop.f32.mrf.mxu0
        %914 = vmatprep.mubr.bf16.mxu0 %v633
        %915 = vmatmul.mubr.bf16.gmra.mxu0 %v632
        %v916 = vpop.f32.mrf.mxu0
        %v917 = vadd.f32 0.0, %v916
        %v918 = vpop.f32.mrf.mxu0
        %v919 = vpop.f32.mrf.mxu0
        %v920 = vadd.f32 0.0, %v919
        %v921 = vpop.f32.mrf.mxu0
        %922 = vdwg.mxu0
        %v923 = vadd.f32 %v410, %v797
        %v924 = vadd.f32 %v411, %v800
        %v925 = vadd.f32 %v412, %v805
        %v926 = vadd.f32 %v413, %v808
        %v927 = vadd.f32 %v414, %v813
        %v928 = vadd.f32 %v415, %v816
        %v929 = vadd.f32 %v416, %v821
        %v930 = vadd.f32 %v417, %v824
        %v931 = vadd.f32 %v418, %v829
        %v932 = vadd.f32 %v419, %v832
        %v933 = vadd.f32 %v420, %v837
        %v934 = vadd.f32 %v421, %v840
        %v935 = vadd.f32 %v422, %v845
        %v936 = vadd.f32 %v423, %v848
        %v937 = vadd.f32 %v424, %v853
        %v938 = vadd.f32 %v425, %v856
        %v939 = vadd.f32 %v426, %v861
        %v940 = vadd.f32 %v427, %v864
        %v941 = vadd.f32 %v428, %v869
        %v942 = vadd.f32 %v429, %v872
        %v943 = vadd.f32 %v430, %v877
        %v944 = vadd.f32 %v431, %v880
        %v945 = vadd.f32 %v432, %v885
        %v946 = vadd.f32 %v433, %v888
        %v947 = vadd.f32 %v434, %v893
        %v948 = vadd.f32 %v435, %v896
        %v949 = vadd.f32 %v436, %v901
        %v950 = vadd.f32 %v437, %v904
        %v951 = vadd.f32 %v438, %v909
        %v952 = vadd.f32 %v439, %v912
        %v953 = vadd.f32 %v440, %v917
        %v954 = vadd.f32 %v441, %v920
        %955 = vst [vmem:[#allocation2] sm:$0xff] %v923
        %956 = vst [vmem:[#allocation2 + $0x8] sm:$0xff] %v924
        %957 = vst [vmem:[#allocation2 + $0x10] sm:$0xff] %v925
        %958 = vst [vmem:[#allocation2 + $0x18] sm:$0xff] %v926
        %959 = vst [vmem:[#allocation2 + $0x20] sm:$0xff] %v927
        %960 = vst [vmem:[#allocation2 + $0x28] sm:$0xff] %v928
        %961 = vst [vmem:[#allocation2 + $0x30] sm:$0xff] %v929
        %962 = vst [vmem:[#allocation2 + $0x38] sm:$0xff] %v930
        %963 = vst [vmem:[#allocation2 + $0x40] sm:$0xff] %v931
        %964 = vst [vmem:[#allocation2 + $0x48] sm:$0xff] %v932
        %965 = vst [vmem:[#allocation2 + $0x50] sm:$0xff] %v933
        %966 = vst [vmem:[#allocation2 + $0x58] sm:$0xff] %v934
        %967 = vst [vmem:[#allocation2 + $0x60] sm:$0xff] %v935
        %968 = vst [vmem:[#allocation2 + $0x68] sm:$0xff] %v936
        %969 = vst [vmem:[#allocation2 + $0x70] sm:$0xff] %v937
        %970 = vst [vmem:[#allocation2 + $0x78] sm:$0xff] %v938
        %971 = vst [vmem:[#allocation2 + $0x80] sm:$0xff] %v939
        %972 = vst [vmem:[#allocation2 + $0x88] sm:$0xff] %v940
        %973 = vst [vmem:[#allocation2 + $0x90] sm:$0xff] %v941
        %974 = vst [vmem:[#allocation2 + $0x98] sm:$0xff] %v942
        %975 = vst [vmem:[#allocation2 + $0xa0] sm:$0xff] %v943
        %976 = vst [vmem:[#allocation2 + $0xa8] sm:$0xff] %v944
        %977 = vst [vmem:[#allocation2 + $0xb0] sm:$0xff] %v945
        %978 = vst [vmem:[#allocation2 + $0xb8] sm:$0xff] %v946
        %979 = vst [vmem:[#allocation2 + $0xc0] sm:$0xff] %v947
        %980 = vst [vmem:[#allocation2 + $0xc8] sm:$0xff] %v948
        %981 = vst [vmem:[#allocation2 + $0xd0] sm:$0xff] %v949
        %982 = vst [vmem:[#allocation2 + $0xd8] sm:$0xff] %v950
        %983 = vst [vmem:[#allocation2 + $0xe0] sm:$0xff] %v951
        %984 = vst [vmem:[#allocation2 + $0xe8] sm:$0xff] %v952
        %985 = vst [vmem:[#allocation2 + $0xf0] sm:$0xff] %v953
        %986 = vst [vmem:[#allocation2 + $0xf8] sm:$0xff] %v954
        %p987 = scmp.eq.s32.totalorder %s19, 1
        // Predicated region
        $region75: #{sag_gcn_forward.6} parent=65 // pred_check
          %p988 = pneg %p987
        $region76: #{sag_gcn_forward.6} parent=65 // pred_check_branch
          %990 = sbr.rel (%p988) target = $region78
        $region77: #{sag_gcn_forward.6} parent=65 // pred_region
          %v991 = vld [vmem:[#allocation2] sm:$0xff]
          %v992 = vld [vmem:[#allocation2 + $0x8] sm:$0xff]
          %v993 = vld [vmem:[#allocation2 + $0x10] sm:$0xff]
          %v994 = vld [vmem:[#allocation2 + $0x18] sm:$0xff]
          %v995 = vld [vmem:[#allocation2 + $0x20] sm:$0xff]
          %v996 = vld [vmem:[#allocation2 + $0x28] sm:$0xff]
          %v997 = vld [vmem:[#allocation2 + $0x30] sm:$0xff]
          %v998 = vld [vmem:[#allocation2 + $0x38] sm:$0xff]
          %v999 = vld [vmem:[#allocation2 + $0x40] sm:$0xff]
          %v1000 = vld [vmem:[#allocation2 + $0x48] sm:$0xff]
          %v1001 = vld [vmem:[#allocation2 + $0x50] sm:$0xff]
          %v1002 = vld [vmem:[#allocation2 + $0x58] sm:$0xff]
          %v1003 = vld [vmem:[#allocation2 + $0x60] sm:$0xff]
          %v1004 = vld [vmem:[#allocation2 + $0x68] sm:$0xff]
          %v1005 = vld [vmem:[#allocation2 + $0x70] sm:$0xff]
          %v1006 = vld [vmem:[#allocation2 + $0x78] sm:$0xff]
          %v1007 = vld [vmem:[#allocation2 + $0x80] sm:$0xff]
          %v1008 = vld [vmem:[#allocation2 + $0x88] sm:$0xff]
          %v1009 = vld [vmem:[#allocation2 + $0x90] sm:$0xff]
          %v1010 = vld [vmem:[#allocation2 + $0x98] sm:$0xff]
          %v1011 = vld [vmem:[#allocation2 + $0xa0] sm:$0xff]
          %v1012 = vld [vmem:[#allocation2 + $0xa8] sm:$0xff]
          %v1013 = vld [vmem:[#allocation2 + $0xb0] sm:$0xff]
          %v1014 = vld [vmem:[#allocation2 + $0xb8] sm:$0xff]
          %v1015 = vld [vmem:[#allocation2 + $0xc0] sm:$0xff]
          %v1016 = vld [vmem:[#allocation2 + $0xc8] sm:$0xff]
          %v1017 = vld [vmem:[#allocation2 + $0xd0] sm:$0xff]
          %v1018 = vld [vmem:[#allocation2 + $0xd8] sm:$0xff]
          %v1019 = vld [vmem:[#allocation2 + $0xe0] sm:$0xff]
          %v1020 = vld [vmem:[#allocation2 + $0xe8] sm:$0xff]
          %v1021 = vld [vmem:[#allocation2 + $0xf0] sm:$0xff]
          %v1022 = vld [vmem:[#allocation2 + $0xf8] sm:$0xff]
          %v1023 = vld [vmem:[%s2] sm:$0x1]
          %v1025 = vlaneseq
          %v1026 = vshrl.u32 %v1025, 7
          %v1027 = vsub.s32 0, %v1026
          %v1028 = vrot.slane %v1023, %v1027
          %v1030 = vadd.f32 %v991, %v1028
          %v1031 = vadd.f32 %v992, %v1028
          %v1032 = vadd.f32 %v993, %v1028
          %v1033 = vadd.f32 %v994, %v1028
          %v1034 = vadd.f32 %v995, %v1028
          %v1035 = vadd.f32 %v996, %v1028
          %v1036 = vadd.f32 %v997, %v1028
          %v1037 = vadd.f32 %v998, %v1028
          %v1038 = vadd.f32 %v999, %v1028
          %v1039 = vadd.f32 %v1000, %v1028
          %v1040 = vadd.f32 %v1001, %v1028
          %v1041 = vadd.f32 %v1002, %v1028
          %v1042 = vadd.f32 %v1003, %v1028
          %v1043 = vadd.f32 %v1004, %v1028
          %v1044 = vadd.f32 %v1005, %v1028
          %v1045 = vadd.f32 %v1006, %v1028
          %v1046 = vadd.f32 %v1007, %v1028
          %v1047 = vadd.f32 %v1008, %v1028
          %v1048 = vadd.f32 %v1009, %v1028
          %v1049 = vadd.f32 %v1010, %v1028
          %v1050 = vadd.f32 %v1011, %v1028
          %v1051 = vadd.f32 %v1012, %v1028
          %v1052 = vadd.f32 %v1013, %v1028
          %v1053 = vadd.f32 %v1014, %v1028
          %v1054 = vadd.f32 %v1015, %v1028
          %v1055 = vadd.f32 %v1016, %v1028
          %v1056 = vadd.f32 %v1017, %v1028
          %v1057 = vadd.f32 %v1018, %v1028
          %v1058 = vadd.f32 %v1019, %v1028
          %v1059 = vadd.f32 %v1020, %v1028
          %v1060 = vadd.f32 %v1021, %v1028
          %v1061 = vadd.f32 %v1022, %v1028
          %v1062 = vmax.f32 %v1030, 0.0
          %v1063 = vmax.f32 %v1031, 0.0
          %v1064 = vmax.f32 %v1032, 0.0
          %v1065 = vmax.f32 %v1033, 0.0
          %v1066 = vmax.f32 %v1034, 0.0
          %v1067 = vmax.f32 %v1035, 0.0
          %v1068 = vmax.f32 %v1036, 0.0
          %v1069 = vmax.f32 %v1037, 0.0
          %v1070 = vmax.f32 %v1038, 0.0
          %v1071 = vmax.f32 %v1039, 0.0
          %v1072 = vmax.f32 %v1040, 0.0
          %v1073 = vmax.f32 %v1041, 0.0
          %v1074 = vmax.f32 %v1042, 0.0
          %v1075 = vmax.f32 %v1043, 0.0
          %v1076 = vmax.f32 %v1044, 0.0
          %v1077 = vmax.f32 %v1045, 0.0
          %v1078 = vmax.f32 %v1046, 0.0
          %v1079 = vmax.f32 %v1047, 0.0
          %v1080 = vmax.f32 %v1048, 0.0
          %v1081 = vmax.f32 %v1049, 0.0
          %v1082 = vmax.f32 %v1050, 0.0
          %v1083 = vmax.f32 %v1051, 0.0
          %v1084 = vmax.f32 %v1052, 0.0
          %v1085 = vmax.f32 %v1053, 0.0
          %v1086 = vmax.f32 %v1054, 0.0
          %v1087 = vmax.f32 %v1055, 0.0
          %v1088 = vmax.f32 %v1056, 0.0
          %v1089 = vmax.f32 %v1057, 0.0
          %v1090 = vmax.f32 %v1058, 0.0
          %v1091 = vmax.f32 %v1059, 0.0
          %v1092 = vmax.f32 %v1060, 0.0
          %v1093 = vmax.f32 %v1061, 0.0
          %1094 = vst [vmem:[%s371] sm:$0xff] %v1062
          %1095 = vst [vmem:[%s371 + $0x8] sm:$0xff] %v1063
          %1096 = vst [vmem:[%s371 + $0x10] sm:$0xff] %v1064
          %1097 = vst [vmem:[%s371 + $0x18] sm:$0xff] %v1065
          %1098 = vst [vmem:[%s371 + $0x20] sm:$0xff] %v1066
          %1099 = vst [vmem:[%s371 + $0x28] sm:$0xff] %v1067
          %1100 = vst [vmem:[%s371 + $0x30] sm:$0xff] %v1068
          %1101 = vst [vmem:[%s371 + $0x38] sm:$0xff] %v1069
          %1102 = vst [vmem:[%s371 + $0x40] sm:$0xff] %v1070
          %1103 = vst [vmem:[%s371 + $0x48] sm:$0xff] %v1071
          %1104 = vst [vmem:[%s371 + $0x50] sm:$0xff] %v1072
          %1105 = vst [vmem:[%s371 + $0x58] sm:$0xff] %v1073
          %1106 = vst [vmem:[%s371 + $0x60] sm:$0xff] %v1074
          %1107 = vst [vmem:[%s371 + $0x68] sm:$0xff] %v1075
          %1108 = vst [vmem:[%s371 + $0x70] sm:$0xff] %v1076
          %1109 = vst [vmem:[%s371 + $0x78] sm:$0xff] %v1077
          %1110 = vst [vmem:[%s371 + $0x80] sm:$0xff] %v1078
          %1111 = vst [vmem:[%s371 + $0x88] sm:$0xff] %v1079
          %1112 = vst [vmem:[%s371 + $0x90] sm:$0xff] %v1080
          %1113 = vst [vmem:[%s371 + $0x98] sm:$0xff] %v1081
          %1114 = vst [vmem:[%s371 + $0xa0] sm:$0xff] %v1082
          %1115 = vst [vmem:[%s371 + $0xa8] sm:$0xff] %v1083
          %1116 = vst [vmem:[%s371 + $0xb0] sm:$0xff] %v1084
          %1117 = vst [vmem:[%s371 + $0xb8] sm:$0xff] %v1085
          %1118 = vst [vmem:[%s371 + $0xc0] sm:$0xff] %v1086
          %1119 = vst [vmem:[%s371 + $0xc8] sm:$0xff] %v1087
          %1120 = vst [vmem:[%s371 + $0xd0] sm:$0xff] %v1088
          %1121 = vst [vmem:[%s371 + $0xd8] sm:$0xff] %v1089
          %1122 = vst [vmem:[%s371 + $0xe0] sm:$0xff] %v1090
          %1123 = vst [vmem:[%s371 + $0xe8] sm:$0xff] %v1091
          %1124 = vst [vmem:[%s371 + $0xf0] sm:$0xff] %v1092
          %1125 = vst [vmem:[%s371 + $0xf8] sm:$0xff] %v1093
        $region78: #{sag_gcn_forward.6} parent=65 // pred_fallthru
          _
        %s1126 = smul.u32 32, %s18
        %p1127 = scmp.lt.s32.totalorder %s1126, 63
        %s1128 = scalar_select %p1127, %s1126, 63
        %s1129 = smul.addr %s1128, 8
        %s1130 = scalar_lea.vmem %s3, %s1129
        // Predicated region
        $region79: #{sag_gcn_forward.6} parent=65 // pred_check
          %p1131 = pneg %p119
        $region80: #{sag_gcn_forward.6} parent=65 // pred_check_branch
          %1133 = sbr.rel (%p1131) target = $region82
        $region81: #{sag_gcn_forward.6} parent=65 // pred_region
          %s1134 = smul.u32 32, %s18
        $region82: #{sag_gcn_forward.6} parent=65 // pred_fallthru
          _
      $region66: #{sag_gcn_forward.6} parent=5 // pred_fallthru
        _
      %p1135 = scmp.le.s32.totalorder 2, %s9
      // Predicated region
      $region83: #{sag_gcn_forward.6} parent=5 // pred_check
        %p1136 = pneg %p1135
      $region84: #{sag_gcn_forward.6} parent=5 // pred_check_branch
        %1138 = sbr.rel (%p1136) target = $region86
      $region85: #{sag_gcn_forward.6} parent=5 // pred_region
        %s1139 = ssub.s32 %s9, 2
        // Predicated region
        $region87: #{sag_gcn_forward.6} parent=85 // pred_check
          %p1140 = pneg %p125
        $region88: #{sag_gcn_forward.6} parent=85 // pred_check_branch
          %1142 = sbr.rel (%p1140) target = $region90
        $region89: #{sag_gcn_forward.6} parent=85 // pred_region
          %s1143 = smul.u32 32, %s20
          %p1144 = scmp.lt.s32.totalorder %s1143, 63
          %s1145 = scalar_select %p1144, %s1143, 63
          %s1146 = smul.addr %s1145, 8
          %s1147 = scalar_lea.vmem %s3, %s1146
        $region90: #{sag_gcn_forward.6} parent=85 // pred_fallthru
          _
      $region86: #{sag_gcn_forward.6} parent=5 // pred_fallthru
        _
    $region6: #{sag_gcn_forward.6} parent=1 // loop_footer
      %s13 = sadd.s32 1, %s9
    $region7: #{sag_gcn_forward.6} parent=1 // loop_footer_branch
      %8 = sbr.rel target = $region3
    $region8: #{sag_gcn_forward.6} parent=1 // loop_exit
      _

// kernel: sag_gcn_forward.7
$region0: #{sag_gcn_forward.7}
  #allocation0 [shape = 'u32[]', space=smem, size = 0x4, offset = 0x4, fixed_abs, tag = 'smem constant byte address 0x4 - core index']
  #allocation1 [shape = 'u32[144,128]{1,0:T(1,128)}', space=vmem, size = 0x12000, scoped, tag = 'internal scratch']
  #allocation2 [shape = 'f32[256,128]{1,0:T(8,128)}', space=vmem, size = 0x20000, scoped, tag = 'scratch operand']
  %s0 = inlined_call_operand.vmem [shape: bf16[512,512], index: 0, kind: input, shape index: {}]
  %s1 = inlined_call_operand.vmem [shape: bf16[512,128], index: 1, kind: input, shape index: {}]
  %s2 = inlined_call_operand.vmem [shape: f32[1,128], index: 2, kind: input, shape index: {}]
  %s3 = inlined_call_operand.vmem [shape: f32[512,128], index: 3, kind: output, shape index: {}]
  %s4 = sld [smem:[#allocation0]]
  $region91: #{sag_gcn_forward.7} parent=0
    _
  %s6 = ssub.s32 1, %s4
  %s7 = scalar_select 0, %s6, %s4
  $region1: #{sag_gcn_forward.7} parent=0
    #allocation3 [shape = 'u8[262144]{0}', space=vmem, size = 0x40000, scoped, tag = 'input window, operand 0']
    loop: start=0, step=1, limit=6
    $region2: #{sag_gcn_forward.7} parent=1 // loop_pre_header
      _
    $region3: #{sag_gcn_forward.7} parent=1 // loop_header
      %s9 = sphi 0, %s13
      %p10 = scmp.ge.s32.totalorder %s9, 6
      %s16 = sphi 0, %s28
      %s17 = sphi 0, %s24
      %s18 = sphi 0, %s16
      %s19 = sphi 0, %s17
      %s20 = sphi 0, %s18
      %s21 = sphi 0, %s19
      %s33 = sphi 0, %s35
      %s36 = sphi 0, %s33
      %s37 = sphi 0, %s36
      %s53 = sphi 0, %s37
      %s59 = sphi 0, %s61
      %s62 = sphi 0, %s59
      %s63 = sphi 0, %s62
      %s79 = sphi 0, %s63
      %s83 = sphi 0, %s83
      %s85 = sphi 0, %s83
      %s86 = sphi 0, %s85
      %s100 = sphi 0, %s86
      %s106 = sphi 0, %s108
      %s109 = sphi 0, %s106
      %s110 = sphi 0, %s109
      %s126 = sphi 0, %s110
    $region4: #{sag_gcn_forward.7} parent=1 // loop_header_branch
      %12 = sbr.rel (%p10) target = $region8
    $region5: #{sag_gcn_forward.7} parent=1 // loop_body
      %s14 = ssub.s32 %s9, 1
      %s15 = ssub.s32 %s9, 2
      %s22 = sadd.s32 1, %s17
      %p23 = scmp.ge.s32.totalorder %s22, 2
      %s24 = scalar_select %p23, 0, %s22
      %s25 = sadd.s32 1, %s16
      %s26 = scalar_select %p23, %s25, %s16
      %p27 = scmp.ge.s32.totalorder %s26, 2
      %s28 = scalar_select %p27, 0, %s26
      %s29 = ssub.s32 %s16, %s28
      %s30 = ssub.s32 %s17, %s24
      %s31 = sor.u32 %s29, %s30
      %p32 = scmp.eq.s32.totalorder %s31, 0
      %s34 = sadd.s32 %s33, 1
      %s35 = scalar_select %p32, %s33, %s34
      %p38 = pneg %p32
      %p39 = scmp.eq.s32.totalorder %s9, 3
      %p40 = por %p38, %p39
      %p41 = scmp.ne.s32.totalorder %s33, %s36
      %p42 = scmp.eq.s32.totalorder %s9, 0
      %p43 = por %p41, %p42
      %p44 = scmp.ne.s32.totalorder %s33, %s36
      %p45 = scmp.eq.s32.totalorder %s14, 3
      %p46 = por %p44, %p45
      %p47 = scmp.ne.s32.totalorder %s36, %s37
      %p48 = scmp.eq.s32.totalorder %s14, 0
      %p49 = por %p47, %p48
      %p50 = scmp.ne.s32.totalorder %s36, %s37
      %p51 = scmp.eq.s32.totalorder %s15, 3
      %p52 = por %p50, %p51
      %p54 = scmp.ne.s32.totalorder %s37, %s53
      %p55 = scmp.eq.s32.totalorder %s15, 0
      %p56 = por %p54, %p55
      %s57 = ssub.s32 %s17, %s24
      %p58 = scmp.eq.s32.totalorder %s57, 0
      %s60 = sadd.s32 %s59, 1
      %s61 = scalar_select %p58, %s59, %s60
      %p64 = pneg %p58
      %p65 = scmp.eq.s32.totalorder %s9, 3
      %p66 = por %p64, %p65
      %p67 = scmp.ne.s32.totalorder %s59, %s62
      %p68 = scmp.eq.s32.totalorder %s9, 0
      %p69 = por %p67, %p68
      %p70 = scmp.ne.s32.totalorder %s59, %s62
      %p71 = scmp.eq.s32.totalorder %s14, 3
      %p72 = por %p70, %p71
      %p73 = scmp.ne.s32.totalorder %s62, %s63
      %p74 = scmp.eq.s32.totalorder %s14, 0
      %p75 = por %p73, %p74
      %p76 = scmp.ne.s32.totalorder %s62, %s63
      %p77 = scmp.eq.s32.totalorder %s15, 3
      %p78 = por %p76, %p77
      %p80 = scmp.ne.s32.totalorder %s63, %s79
      %p81 = scmp.eq.s32.totalorder %s15, 0
      %p82 = por %p80, %p81
      %s84 = sadd.s32 %s83, 1
      %p87 = scmp.eq.s32.totalorder %s9, 3
      %p88 = scmp.ne.s32.totalorder %s83, %s85
      %p89 = scmp.eq.s32.totalorder %s9, 0
      %p90 = por %p88, %p89
      %p91 = scmp.ne.s32.totalorder %s83, %s85
      %p92 = scmp.eq.s32.totalorder %s14, 3
      %p93 = por %p91, %p92
      %p94 = scmp.ne.s32.totalorder %s85, %s86
      %p95 = scmp.eq.s32.totalorder %s14, 0
      %p96 = por %p94, %p95
      %p97 = scmp.ne.s32.totalorder %s85, %s86
      %p98 = scmp.eq.s32.totalorder %s15, 3
      %p99 = por %p97, %p98
      %p101 = scmp.ne.s32.totalorder %s86, %s100
      %p102 = scmp.eq.s32.totalorder %s15, 0
      %p103 = por %p101, %p102
      %s104 = ssub.s32 %s16, %s28
      %p105 = scmp.eq.s32.totalorder %s104, 0
      %s107 = sadd.s32 %s106, 1
      %s108 = scalar_select %p105, %s106, %s107
      %p111 = pneg %p105
      %p112 = scmp.eq.s32.totalorder %s9, 3
      %p113 = por %p111, %p112
      %p114 = scmp.ne.s32.totalorder %s106, %s109
      %p115 = scmp.eq.s32.totalorder %s9, 0
      %p116 = por %p114, %p115
      %p117 = scmp.ne.s32.totalorder %s106, %s109
      %p118 = scmp.eq.s32.totalorder %s14, 3
      %p119 = por %p117, %p118
      %p120 = scmp.ne.s32.totalorder %s109, %s110
      %p121 = scmp.eq.s32.totalorder %s14, 0
      %p122 = por %p120, %p121
      %p123 = scmp.ne.s32.totalorder %s109, %s110
      %p124 = scmp.eq.s32.totalorder %s15, 3
      %p125 = por %p123, %p124
      %p127 = scmp.ne.s32.totalorder %s110, %s126
      %p128 = scmp.eq.s32.totalorder %s15, 0
      %p129 = por %p127, %p128
      %p130 = scmp.le.s32.totalorder 1, %s9
      %p131 = scmp.lt.s32.totalorder %s9, 5
      %p132 = pnand %p130, %p131
      %p133 = pneg %p132
      // Predicated region
      $region9: #{sag_gcn_forward.7} parent=5 // pred_check
        _
      $region10: #{sag_gcn_forward.7} parent=5 // pred_check_branch
        %135 = sbr.rel (%p132) target = $region12
      $region11: #{sag_gcn_forward.7} parent=5 // pred_region
        %s136 = ssub.s32 %s9, 1
        // Predicated region
        $region13: #{sag_gcn_forward.7} parent=11 // pred_check
          %p137 = pneg %p96
        $region14: #{sag_gcn_forward.7} parent=11 // pred_check_branch
          %139 = sbr.rel (%p137) target = $region16
        $region15: #{sag_gcn_forward.7} parent=11 // pred_region
          _
        $region16: #{sag_gcn_forward.7} parent=11 // pred_fallthru
          _
      $region12: #{sag_gcn_forward.7} parent=5 // pred_fallthru
        _
      %p140 = scmp.lt.s32.totalorder %s9, 4
      // Predicated region
      $region17: #{sag_gcn_forward.7} parent=5 // pred_check
        %p141 = pneg %p140
      $region18: #{sag_gcn_forward.7} parent=5 // pred_check_branch
        %143 = sbr.rel (%p141) target = $region20
      $region19: #{sag_gcn_forward.7} parent=5 // pred_region
        // Predicated region
        $region21: #{sag_gcn_forward.7} parent=19 // pred_check
          %p144 = pneg %p43
        $region22: #{sag_gcn_forward.7} parent=19 // pred_check_branch
          %146 = sbr.rel (%p144) target = $region24
        $region23: #{sag_gcn_forward.7} parent=19 // pred_region
          %s147 = sand.u32 %s33, 1
          %s148 = sand.u32 %s33, 1
          %s149 = smul.addr %s148, 256
          %s150 = scalar_lea.vmem [#allocation3], %s149
          %s151 = smul.u32 32, %s16
          %s152 = smul.u32 2, %s17
          %s153 = smul.addr %s151, 4
          %s154 = sadd.s32 %s152, %s153
          %s155 = smul.addr %s154, 4
          %s156 = scalar_lea.vmem %s0, %s155
          // Predicated region
          $region25: #{sag_gcn_forward.7} parent=23 // pred_check
            _
          $region26: #{sag_gcn_forward.7} parent=23 // pred_check_branch
            %158 = sbr.rel (0) target = $region28
          $region27: #{sag_gcn_forward.7} parent=23 // pred_region
            // Predicated region
            $region29: #{sag_gcn_forward.7} parent=27 // pred_check
              _
            $region30: #{sag_gcn_forward.7} parent=27 // pred_check_branch
              %160 = sbr.rel (0) target = $region32
            $region31: #{sag_gcn_forward.7} parent=27 // pred_region
              // Predicated region
              $region44: #{sag_gcn_forward.7} parent=31 // pred_check
                _
              $region45: #{sag_gcn_forward.7} parent=31 // pred_check_branch
                %238 = sbr.rel (0) target = $region47
              $region46: #{sag_gcn_forward.7} parent=31 // pred_region
                loop: start=0, step=1, limit=1
                $region48: #{sag_gcn_forward.7} parent=46 // loop_pre_header
                  _
                $region49: #{sag_gcn_forward.7} parent=46 // loop_header
                  %s240 = sphi 0, %s244
                  %p241 = scmp.ge.s32.totalorder %s240, 1
                  %s245 = sphi %s156, %s156
                  %s246 = sphi %s150, %s150
                $region50: #{sag_gcn_forward.7} parent=46 // loop_header_branch
                  %243 = sbr.rel (%p241) target = $region54
                $region51: #{sag_gcn_forward.7} parent=46 // loop_body
                  %v247 = vld [vmem:[%s245] sm:$0xff]
                  %248 = vst [vmem:[%s246] sm:$0xff] %v247
                  %v249 = vld [vmem:[%s245 + $0x10] sm:$0xff]
                  %250 = vst [vmem:[%s246 + $0x8] sm:$0xff] %v249
                  %v251 = vld [vmem:[%s245 + $0x20] sm:$0xff]
                  %252 = vst [vmem:[%s246 + $0x10] sm:$0xff] %v251
                  %v253 = vld [vmem:[%s245 + $0x30] sm:$0xff]
                  %254 = vst [vmem:[%s246 + $0x18] sm:$0xff] %v253
                  %v255 = vld [vmem:[%s245 + $0x40] sm:$0xff]
                  %256 = vst [vmem:[%s246 + $0x20] sm:$0xff] %v255
                  %v257 = vld [vmem:[%s245 + $0x50] sm:$0xff]
                  %258 = vst [vmem:[%s246 + $0x28] sm:$0xff] %v257
                  %v259 = vld [vmem:[%s245 + $0x60] sm:$0xff]
                  %260 = vst [vmem:[%s246 + $0x30] sm:$0xff] %v259
                  %v261 = vld [vmem:[%s245 + $0x70] sm:$0xff]
                  %262 = vst [vmem:[%s246 + $0x38] sm:$0xff] %v261
                  %v263 = vld [vmem:[%s245 + $0x80] sm:$0xff]
                  %264 = vst [vmem:[%s246 + $0x40] sm:$0xff] %v263
                  %v265 = vld [vmem:[%s245 + $0x90] sm:$0xff]
                  %266 = vst [vmem:[%s246 + $0x48] sm:$0xff] %v265
                  %v267 = vld [vmem:[%s245 + $0xa0] sm:$0xff]
                  %268 = vst [vmem:[%s246 + $0x50] sm:$0xff] %v267
                  %v269 = vld [vmem:[%s245 + $0xb0] sm:$0xff]
                  %270 = vst [vmem:[%s246 + $0x58] sm:$0xff] %v269
                  %v271 = vld [vmem:[%s245 + $0xc0] sm:$0xff]
                  %272 = vst [vmem:[%s246 + $0x60] sm:$0xff] %v271
                  %v273 = vld [vmem:[%s245 + $0xd0] sm:$0xff]
                  %274 = vst [vmem:[%s246 + $0x68] sm:$0xff] %v273
                  %v275 = vld [vmem:[%s245 + $0xe0] sm:$0xff]
                  %276 = vst [vmem:[%s246 + $0x70] sm:$0xff] %v275
                  %v277 = vld [vmem:[%s245 + $0xf0] sm:$0xff]
                  %278 = vst [vmem:[%s246 + $0x78] sm:$0xff] %v277
                  %v279 = vld [vmem:[%s245 + $0x100] sm:$0xff]
                  %280 = vst [vmem:[%s246 + $0x80] sm:$0xff] %v279
                  %v281 = vld [vmem:[%s245 + $0x110] sm:$0xff]
                  %282 = vst [vmem:[%s246 + $0x88] sm:$0xff] %v281
                  %v283 = vld [vmem:[%s245 + $0x120] sm:$0xff]
                  %284 = vst [vmem:[%s246 + $0x90] sm:$0xff] %v283
                  %v285 = vld [vmem:[%s245 + $0x130] sm:$0xff]
                  %286 = vst [vmem:[%s246 + $0x98] sm:$0xff] %v285
                  %v287 = vld [vmem:[%s245 + $0x140] sm:$0xff]
                  %288 = vst [vmem:[%s246 + $0xa0] sm:$0xff] %v287
                  %v289 = vld [vmem:[%s245 + $0x150] sm:$0xff]
                  %290 = vst [vmem:[%s246 + $0xa8] sm:$0xff] %v289
                  %v291 = vld [vmem:[%s245 + $0x160] sm:$0xff]
                  %292 = vst [vmem:[%s246 + $0xb0] sm:$0xff] %v291
                  %v293 = vld [vmem:[%s245 + $0x170] sm:$0xff]
                  %294 = vst [vmem:[%s246 + $0xb8] sm:$0xff] %v293
                  %v295 = vld [vmem:[%s245 + $0x180] sm:$0xff]
                  %296 = vst [vmem:[%s246 + $0xc0] sm:$0xff] %v295
                  %v297 = vld [vmem:[%s245 + $0x190] sm:$0xff]
                  %298 = vst [vmem:[%s246 + $0xc8] sm:$0xff] %v297
                  %v299 = vld [vmem:[%s245 + $0x1a0] sm:$0xff]
                  %300 = vst [vmem:[%s246 + $0xd0] sm:$0xff] %v299
                  %v301 = vld [vmem:[%s245 + $0x1b0] sm:$0xff]
                  %302 = vst [vmem:[%s246 + $0xd8] sm:$0xff] %v301
                  %v303 = vld [vmem:[%s245 + $0x1c0] sm:$0xff]
                  %304 = vst [vmem:[%s246 + $0xe0] sm:$0xff] %v303
                  %v305 = vld [vmem:[%s245 + $0x1d0] sm:$0xff]
                  %306 = vst [vmem:[%s246 + $0xe8] sm:$0xff] %v305
                  %v307 = vld [vmem:[%s245 + $0x1e0] sm:$0xff]
                  %308 = vst [vmem:[%s246 + $0xf0] sm:$0xff] %v307
                  %v309 = vld [vmem:[%s245 + $0x1f0] sm:$0xff]
                  %310 = vst [vmem:[%s246 + $0xf8] sm:$0xff] %v309
                $region52: #{sag_gcn_forward.7} parent=46 // loop_footer
                  %s244 = sadd.s32 1, %s240
                $region53: #{sag_gcn_forward.7} parent=46 // loop_footer_branch
                  %239 = sbr.rel target = $region49
                $region54: #{sag_gcn_forward.7} parent=46 // loop_exit
                  _
              $region47: #{sag_gcn_forward.7} parent=31 // pred_fallthru
                _
              // Predicated region
              $region55: #{sag_gcn_forward.7} parent=31 // pred_check
                _
              $region56: #{sag_gcn_forward.7} parent=31 // pred_check_branch
                %312 = sbr.rel target = $region58
              $region57: #{sag_gcn_forward.7} parent=31 // pred_region
                _
              $region58: #{sag_gcn_forward.7} parent=31 // pred_fallthru
                _
            $region32: #{sag_gcn_forward.7} parent=27 // pred_fallthru
              _
            // Predicated region
            $region33: #{sag_gcn_forward.7} parent=27 // pred_check
              _
            $region34: #{sag_gcn_forward.7} parent=27 // pred_check_branch
              %162 = sbr.rel target = $region36
            $region35: #{sag_gcn_forward.7} parent=27 // pred_region
              %s164 = ssub.s32 256, 1
              loop: start=0, step=1, limit=1
              $region37: #{sag_gcn_forward.7} parent=35 // loop_pre_header
                _
              $region38: #{sag_gcn_forward.7} parent=35 // loop_header
                %s166 = sphi 0, %s170
                %p167 = scmp.ge.s32.totalorder %s166, 1
                %s171 = sphi %s156, %s156
                %s172 = sphi %s150, %s150
              $region39: #{sag_gcn_forward.7} parent=35 // loop_header_branch
                %169 = sbr.rel (%p167) target = $region43
              $region40: #{sag_gcn_forward.7} parent=35 // loop_body
                %v173 = vld [vmem:[%s171] sm:%s164]
                %174 = vst [vmem:[%s172] sm:%s164] %v173
                %v175 = vld [vmem:[%s171 + $0x10] sm:%s164]
                %176 = vst [vmem:[%s172 + $0x8] sm:%s164] %v175
                %v177 = vld [vmem:[%s171 + $0x20] sm:%s164]
                %178 = vst [vmem:[%s172 + $0x10] sm:%s164] %v177
                %v179 = vld [vmem:[%s171 + $0x30] sm:%s164]
                %180 = vst [vmem:[%s172 + $0x18] sm:%s164] %v179
                %v181 = vld [vmem:[%s171 + $0x40] sm:%s164]
                %182 = vst [vmem:[%s172 + $0x20] sm:%s164] %v181
                %v183 = vld [vmem:[%s171 + $0x50] sm:%s164]
                %184 = vst [vmem:[%s172 + $0x28] sm:%s164] %v183
                %v185 = vld [vmem:[%s171 + $0x60] sm:%s164]
                %186 = vst [vmem:[%s172 + $0x30] sm:%s164] %v185
                %v187 = vld [vmem:[%s171 + $0x70] sm:%s164]
                %188 = vst [vmem:[%s172 + $0x38] sm:%s164] %v187
                %v189 = vld [vmem:[%s171 + $0x80] sm:%s164]
                %190 = vst [vmem:[%s172 + $0x40] sm:%s164] %v189
                %v191 = vld [vmem:[%s171 + $0x90] sm:%s164]
                %192 = vst [vmem:[%s172 + $0x48] sm:%s164] %v191
                %v193 = vld [vmem:[%s171 + $0xa0] sm:%s164]
                %194 = vst [vmem:[%s172 + $0x50] sm:%s164] %v193
                %v195 = vld [vmem:[%s171 + $0xb0] sm:%s164]
                %196 = vst [vmem:[%s172 + $0x58] sm:%s164] %v195
                %v197 = vld [vmem:[%s171 + $0xc0] sm:%s164]
                %198 = vst [vmem:[%s172 + $0x60] sm:%s164] %v197
                %v199 = vld [vmem:[%s171 + $0xd0] sm:%s164]
                %200 = vst [vmem:[%s172 + $0x68] sm:%s164] %v199
                %v201 = vld [vmem:[%s171 + $0xe0] sm:%s164]
                %202 = vst [vmem:[%s172 + $0x70] sm:%s164] %v201
                %v203 = vld [vmem:[%s171 + $0xf0] sm:%s164]
                %204 = vst [vmem:[%s172 + $0x78] sm:%s164] %v203
                %v205 = vld [vmem:[%s171 + $0x100] sm:%s164]
                %206 = vst [vmem:[%s172 + $0x80] sm:%s164] %v205
                %v207 = vld [vmem:[%s171 + $0x110] sm:%s164]
                %208 = vst [vmem:[%s172 + $0x88] sm:%s164] %v207
                %v209 = vld [vmem:[%s171 + $0x120] sm:%s164]
                %210 = vst [vmem:[%s172 + $0x90] sm:%s164] %v209
                %v211 = vld [vmem:[%s171 + $0x130] sm:%s164]
                %212 = vst [vmem:[%s172 + $0x98] sm:%s164] %v211
                %v213 = vld [vmem:[%s171 + $0x140] sm:%s164]
                %214 = vst [vmem:[%s172 + $0xa0] sm:%s164] %v213
                %v215 = vld [vmem:[%s171 + $0x150] sm:%s164]
                %216 = vst [vmem:[%s172 + $0xa8] sm:%s164] %v215
                %v217 = vld [vmem:[%s171 + $0x160] sm:%s164]
                %218 = vst [vmem:[%s172 + $0xb0] sm:%s164] %v217
                %v219 = vld [vmem:[%s171 + $0x170] sm:%s164]
                %220 = vst [vmem:[%s172 + $0xb8] sm:%s164] %v219
                %v221 = vld [vmem:[%s171 + $0x180] sm:%s164]
                %222 = vst [vmem:[%s172 + $0xc0] sm:%s164] %v221
                %v223 = vld [vmem:[%s171 + $0x190] sm:%s164]
                %224 = vst [vmem:[%s172 + $0xc8] sm:%s164] %v223
                %v225 = vld [vmem:[%s171 + $0x1a0] sm:%s164]
                %226 = vst [vmem:[%s172 + $0xd0] sm:%s164] %v225
                %v227 = vld [vmem:[%s171 + $0x1b0] sm:%s164]
                %228 = vst [vmem:[%s172 + $0xd8] sm:%s164] %v227
                %v229 = vld [vmem:[%s171 + $0x1c0] sm:%s164]
                %230 = vst [vmem:[%s172 + $0xe0] sm:%s164] %v229
                %v231 = vld [vmem:[%s171 + $0x1d0] sm:%s164]
                %232 = vst [vmem:[%s172 + $0xe8] sm:%s164] %v231
                %v233 = vld [vmem:[%s171 + $0x1e0] sm:%s164]
                %234 = vst [vmem:[%s172 + $0xf0] sm:%s164] %v233
                %v235 = vld [vmem:[%s171 + $0x1f0] sm:%s164]
                %236 = vst [vmem:[%s172 + $0xf8] sm:%s164] %v235
              $region41: #{sag_gcn_forward.7} parent=35 // loop_footer
                %s170 = sadd.s32 1, %s166
              $region42: #{sag_gcn_forward.7} parent=35 // loop_footer_branch
                %165 = sbr.rel target = $region38
              $region43: #{sag_gcn_forward.7} parent=35 // loop_exit
                _
            $region36: #{sag_gcn_forward.7} parent=27 // pred_fallthru
              _
          $region28: #{sag_gcn_forward.7} parent=23 // pred_fallthru
            _
          %313 = vnop
        $region24: #{sag_gcn_forward.7} parent=19 // pred_fallthru
          _
        // Predicated region
        $region59: #{sag_gcn_forward.7} parent=19 // pred_check
          %p314 = pneg %p69
        $region60: #{sag_gcn_forward.7} parent=19 // pred_check_branch
          %316 = sbr.rel (%p314) target = $region62
        $region61: #{sag_gcn_forward.7} parent=19 // pred_region
          %s317 = smul.u32 32, %s17
          %p318 = scmp.lt.s32.totalorder %s317, 63
          %s319 = scalar_select %p318, %s317, 63
          %s320 = smul.addr %s319, 4
          %s321 = scalar_lea.vmem %s1, %s320
          %s322 = smul.u32 32, %s17
        $region62: #{sag_gcn_forward.7} parent=19 // pred_fallthru
          _
      $region20: #{sag_gcn_forward.7} parent=5 // pred_fallthru
        _
      %p323 = scmp.le.s32.totalorder 1, %s9
      %p324 = scmp.lt.s32.totalorder %s9, 5
      %p325 = pnand %p323, %p324
      %p326 = pneg %p325
      // Predicated region
      $region63: #{sag_gcn_forward.7} parent=5 // pred_check
        _
      $region64: #{sag_gcn_forward.7} parent=5 // pred_check_branch
        %328 = sbr.rel (%p325) target = $region66
      $region65: #{sag_gcn_forward.7} parent=5 // pred_region
        %s329 = ssub.s32 %s9, 1
        %s330 = sand.u32 %s36, 1
        %s331 = sand.u32 %s36, 1
        %s332 = smul.addr %s331, 256
        %s333 = scalar_lea.vmem [#allocation3], %s332
        // Predicated region
        $region67: #{sag_gcn_forward.7} parent=65 // pred_check
          %p334 = pneg %p49
        $region68: #{sag_gcn_forward.7} parent=65 // pred_check_branch
          %336 = sbr.rel (%p334) target = $region70
        $region69: #{sag_gcn_forward.7} parent=65 // pred_region
          _
        $region70: #{sag_gcn_forward.7} parent=65 // pred_fallthru
          _
        %s337 = sand.u32 %s36, 1
        %s338 = sand.u32 %s36, 1
        %s339 = smul.addr %s338, 256
        %s340 = scalar_lea.vmem [#allocation3], %s339
        %p341 = pneg %p49
        %p342 = pneg %p46
        %s343 = smul.u32 32, %s19
        %p344 = scmp.lt.s32.totalorder %s343, 63
        %s345 = scalar_select %p344, %s343, 63
        %s346 = smul.addr %s345, 4
        %s347 = scalar_lea.vmem %s1, %s346
        %p348 = pneg %p75
        %p349 = pneg %p72
        %p350 = pneg %p96
        %p351 = pneg %p93
        %p352 = pneg %p122
        %p353 = pneg %p119
        %s354 = smul.u32 32, %s18
        %p355 = scmp.lt.s32.totalorder %s354, 63
        %s356 = scalar_select %p355, %s354, 63
        %s357 = smul.addr %s356, 8
        %s358 = scalar_lea.vmem %s3, %s357
        %s359 = smul.u32 32, %s18
        %s360 = smul.u32 2, %s19
        %s361 = smul.u32 32, %s19
        %p362 = scmp.lt.s32.totalorder %s361, 63
        %s363 = scalar_select %p362, %s361, 63
        %s364 = smul.addr %s363, 4
        %s365 = scalar_lea.vmem %s1, %s364
        %s366 = smul.u32 32, %s19
        %s367 = smul.u32 32, %s18
        %p368 = scmp.lt.s32.totalorder %s367, 63
        %s369 = scalar_select %p368, %s367, 63
        %s370 = smul.addr %s369, 8
        %s371 = scalar_lea.vmem %s3, %s370
        %s372 = smul.u32 32, %s18
        %p374 = scmp.eq.s32.totalorder %s19, 0
        // Predicated region
        $region71: #{sag_gcn_forward.7} parent=65 // pred_check
          %p375 = pneg %p374
        $region72: #{sag_gcn_forward.7} parent=65 // pred_check_branch
          %377 = sbr.rel (%p375) target = $region74
        $region73: #{sag_gcn_forward.7} parent=65 // pred_region
          %378 = vst [vmem:[#allocation2] sm:$0xff] 0.0
          %379 = vst [vmem:[#allocation2 + $0x8] sm:$0xff] 0.0
          %380 = vst [vmem:[#allocation2 + $0x10] sm:$0xff] 0.0
          %381 = vst [vmem:[#allocation2 + $0x18] sm:$0xff] 0.0
          %382 = vst [vmem:[#allocation2 + $0x20] sm:$0xff] 0.0
          %383 = vst [vmem:[#allocation2 + $0x28] sm:$0xff] 0.0
          %384 = vst [vmem:[#allocation2 + $0x30] sm:$0xff] 0.0
          %385 = vst [vmem:[#allocation2 + $0x38] sm:$0xff] 0.0
          %386 = vst [vmem:[#allocation2 + $0x40] sm:$0xff] 0.0
          %387 = vst [vmem:[#allocation2 + $0x48] sm:$0xff] 0.0
          %388 = vst [vmem:[#allocation2 + $0x50] sm:$0xff] 0.0
          %389 = vst [vmem:[#allocation2 + $0x58] sm:$0xff] 0.0
          %390 = vst [vmem:[#allocation2 + $0x60] sm:$0xff] 0.0
          %391 = vst [vmem:[#allocation2 + $0x68] sm:$0xff] 0.0
          %392 = vst [vmem:[#allocation2 + $0x70] sm:$0xff] 0.0
          %393 = vst [vmem:[#allocation2 + $0x78] sm:$0xff] 0.0
          %394 = vst [vmem:[#allocation2 + $0x80] sm:$0xff] 0.0
          %395 = vst [vmem:[#allocation2 + $0x88] sm:$0xff] 0.0
          %396 = vst [vmem:[#allocation2 + $0x90] sm:$0xff] 0.0
          %397 = vst [vmem:[#allocation2 + $0x98] sm:$0xff] 0.0
          %398 = vst [vmem:[#allocation2 + $0xa0] sm:$0xff] 0.0
          %399 = vst [vmem:[#allocation2 + $0xa8] sm:$0xff] 0.0
          %400 = vst [vmem:[#allocation2 + $0xb0] sm:$0xff] 0.0
          %401 = vst [vmem:[#allocation2 + $0xb8] sm:$0xff] 0.0
          %402 = vst [vmem:[#allocation2 + $0xc0] sm:$0xff] 0.0
          %403 = vst [vmem:[#allocation2 + $0xc8] sm:$0xff] 0.0
          %404 = vst [vmem:[#allocation2 + $0xd0] sm:$0xff] 0.0
          %405 = vst [vmem:[#allocation2 + $0xd8] sm:$0xff] 0.0
          %406 = vst [vmem:[#allocation2 + $0xe0] sm:$0xff] 0.0
          %407 = vst [vmem:[#allocation2 + $0xe8] sm:$0xff] 0.0
          %408 = vst [vmem:[#allocation2 + $0xf0] sm:$0xff] 0.0
          %409 = vst [vmem:[#allocation2 + $0xf8] sm:$0xff] 0.0
        $region74: #{sag_gcn_forward.7} parent=65 // pred_fallthru
          _
        %v410 = vld [vmem:[#allocation2] sm:$0xff]
        %v411 = vld [vmem:[#allocation2 + $0x8] sm:$0xff]
        %v412 = vld [vmem:[#allocation2 + $0x10] sm:$0xff]
        %v413 = vld [vmem:[#allocation2 + $0x18] sm:$0xff]
        %v414 = vld [vmem:[#allocation2 + $0x20] sm:$0xff]
        %v415 = vld [vmem:[#allocation2 + $0x28] sm:$0xff]
        %v416 = vld [vmem:[#allocation2 + $0x30] sm:$0xff]
        %v417 = vld [vmem:[#allocation2 + $0x38] sm:$0xff]
        %v418 = vld [vmem:[#allocation2 + $0x40] sm:$0xff]
        %v419 = vld [vmem:[#allocation2 + $0x48] sm:$0xff]
        %v420 = vld [vmem:[#allocation2 + $0x50] sm:$0xff]
        %v421 = vld [vmem:[#allocation2 + $0x58] sm:$0xff]
        %v422 = vld [vmem:[#allocation2 + $0x60] sm:$0xff]
        %v423 = vld [vmem:[#allocation2 + $0x68] sm:$0xff]
        %v424 = vld [vmem:[#allocation2 + $0x70] sm:$0xff]
        %v425 = vld [vmem:[#allocation2 + $0x78] sm:$0xff]
        %v426 = vld [vmem:[#allocation2 + $0x80] sm:$0xff]
        %v427 = vld [vmem:[#allocation2 + $0x88] sm:$0xff]
        %v428 = vld [vmem:[#allocation2 + $0x90] sm:$0xff]
        %v429 = vld [vmem:[#allocation2 + $0x98] sm:$0xff]
        %v430 = vld [vmem:[#allocation2 + $0xa0] sm:$0xff]
        %v431 = vld [vmem:[#allocation2 + $0xa8] sm:$0xff]
        %v432 = vld [vmem:[#allocation2 + $0xb0] sm:$0xff]
        %v433 = vld [vmem:[#allocation2 + $0xb8] sm:$0xff]
        %v434 = vld [vmem:[#allocation2 + $0xc0] sm:$0xff]
        %v435 = vld [vmem:[#allocation2 + $0xc8] sm:$0xff]
        %v436 = vld [vmem:[#allocation2 + $0xd0] sm:$0xff]
        %v437 = vld [vmem:[#allocation2 + $0xd8] sm:$0xff]
        %v438 = vld [vmem:[#allocation2 + $0xe0] sm:$0xff]
        %v439 = vld [vmem:[#allocation2 + $0xe8] sm:$0xff]
        %v440 = vld [vmem:[#allocation2 + $0xf0] sm:$0xff]
        %v441 = vld [vmem:[#allocation2 + $0xf8] sm:$0xff]
        %v442 = vld [vmem:[%s333] sm:$0xff]
        %v443 = vld [vmem:[%s333 + $0x8] sm:$0xff]
        %v444 = vld [vmem:[%s333 + $0x10] sm:$0xff]
        %v445 = vld [vmem:[%s333 + $0x18] sm:$0xff]
        %v446 = vld [vmem:[%s333 + $0x20] sm:$0xff]
        %v447 = vld [vmem:[%s333 + $0x28] sm:$0xff]
        %v448 = vld [vmem:[%s333 + $0x30] sm:$0xff]
        %v449 = vld [vmem:[%s333 + $0x38] sm:$0xff]
        %v450 = vld [vmem:[%s333 + $0x40] sm:$0xff]
        %v451 = vld [vmem:[%s333 + $0x48] sm:$0xff]
        %v452 = vld [vmem:[%s333 + $0x50] sm:$0xff]
        %v453 = vld [vmem:[%s333 + $0x58] sm:$0xff]
        %v454 = vld [vmem:[%s333 + $0x60] sm:$0xff]
        %v455 = vld [vmem:[%s333 + $0x68] sm:$0xff]
        %v456 = vld [vmem:[%s333 + $0x70] sm:$0xff]
        %v457 = vld [vmem:[%s333 + $0x78] sm:$0xff]
        %v458 = vld [vmem:[%s333 + $0x80] sm:$0xff]
        %v459 = vld [vmem:[%s333 + $0x88] sm:$0xff]
        %v460 = vld [vmem:[%s333 + $0x90] sm:$0xff]
        %v461 = vld [vmem:[%s333 + $0x98] sm:$0xff]
        %v462 = vld [vmem:[%s333 + $0xa0] sm:$0xff]
        %v463 = vld [vmem:[%s333 + $0xa8] sm:$0xff]
        %v464 = vld [vmem:[%s333 + $0xb0] sm:$0xff]
        %v465 = vld [vmem:[%s333 + $0xb8] sm:$0xff]
        %v466 = vld [vmem:[%s333 + $0xc0] sm:$0xff]
        %v467 = vld [vmem:[%s333 + $0xc8] sm:$0xff]
        %v468 = vld [vmem:[%s333 + $0xd0] sm:$0xff]
        %v469 = vld [vmem:[%s333 + $0xd8] sm:$0xff]
        %v470 = vld [vmem:[%s333 + $0xe0] sm:$0xff]
        %v471 = vld [vmem:[%s333 + $0xe8] sm:$0xff]
        %v472 = vld [vmem:[%s333 + $0xf0] sm:$0xff]
        %v473 = vld [vmem:[%s333 + $0xf8] sm:$0xff]
        %v474 = vld [vmem:[%s365] sm:$0xf]
        %v475 = vld [vmem:[%s365 + $0x4] sm:$0xf]
        %v476 = vld [vmem:[%s365 + $0x8] sm:$0xf]
        %v477 = vld [vmem:[%s365 + $0xc] sm:$0xf]
        %v478 = vld [vmem:[%s365 + $0x10] sm:$0xf]
        %v479 = vld [vmem:[%s365 + $0x14] sm:$0xf]
        %v480 = vld [vmem:[%s365 + $0x18] sm:$0xf]
        %v481 = vld [vmem:[%s365 + $0x1c] sm:$0xf]
        %v482 = vld [vmem:[%s365 + $0x20] sm:$0xf]
        %v483 = vld [vmem:[%s365 + $0x24] sm:$0xf]
        %v484 = vld [vmem:[%s365 + $0x28] sm:$0xf]
        %v485 = vld [vmem:[%s365 + $0x2c] sm:$0xf]
        %v486 = vld [vmem:[%s365 + $0x30] sm:$0xf]
        %v487 = vld [vmem:[%s365 + $0x34] sm:$0xf]
        %v488 = vld [vmem:[%s365 + $0x38] sm:$0xf]
        %v489 = vld [vmem:[%s365 + $0x3c] sm:$0xf]
        %v490 = vld [vmem:[%s365 + $0x40] sm:$0xf]
        %v491 = vld [vmem:[%s365 + $0x44] sm:$0xf]
        %v492 = vld [vmem:[%s365 + $0x48] sm:$0xf]
        %v493 = vld [vmem:[%s365 + $0x4c] sm:$0xf]
        %v494 = vld [vmem:[%s365 + $0x50] sm:$0xf]
        %v495 = vld [vmem:[%s365 + $0x54] sm:$0xf]
        %v496 = vld [vmem:[%s365 + $0x58] sm:$0xf]
        %v497 = vld [vmem:[%s365 + $0x5c] sm:$0xf]
        %v498 = vld [vmem:[%s365 + $0x60] sm:$0xf]
        %v499 = vld [vmem:[%s365 + $0x64] sm:$0xf]
        %v500 = vld [vmem:[%s365 + $0x68] sm:$0xf]
        %v501 = vld [vmem:[%s365 + $0x6c] sm:$0xf]
        %v502 = vld [vmem:[%s365 + $0x70] sm:$0xf]
        %v503 = vld [vmem:[%s365 + $0x74] sm:$0xf]
        %v504 = vld [vmem:[%s365 + $0x78] sm:$0xf]
        %v505 = vld [vmem:[%s365 + $0x7c] sm:$0xf]
        %v538 = vunpack.c.l.b16 %v442
        %v539 = vunpack.c.h.b16 %v442
        %v540 = vunpack.c.l.b16 %v443
        %v541 = vunpack.c.h.b16 %v443
        %v542 = vunpack.c.l.b16 %v444
        %v543 = vunpack.c.h.b16 %v444
        %v544 = vunpack.c.l.b16 %v445
        %v545 = vunpack.c.h.b16 %v445
        %v546 = vunpack.c.l.b16 %v446
        %v547 = vunpack.c.h.b16 %v446
        %v548 = vunpack.c.l.b16 %v447
        %v549 = vunpack.c.h.b16 %v447
        %v550 = vunpack.c.l.b16 %v448
        %v551 = vunpack.c.h.b16 %v448
        %v552 = vunpack.c.l.b16 %v449
        %v553 = vunpack.c.h.b16 %v449
        %v554 = vunpack.c.l.b16 %v450
        %v555 = vunpack.c.h.b16 %v450
        %v556 = vunpack.c.l.b16 %v451
        %v557 = vunpack.c.h.b16 %v451
        %v558 = vunpack.c.l.b16 %v452
        %v559 = vunpack.c.h.b16 %v452
        %v560 = vunpack.c.l.b16 %v453
        %v561 = vunpack.c.h.b16 %v453
        %v562 = vunpack.c.l.b16 %v454
        %v563 = vunpack.c.h.b16 %v454
        %v564 = vunpack.c.l.b16 %v455
        %v565 = vunpack.c.h.b16 %v455
        %v566 = vunpack.c.l.b16 %v456
        %v567 = vunpack.c.h.b16 %v456
        %v568 = vunpack.c.l.b16 %v457
        %v569 = vunpack.c.h.b16 %v457
        %v570 = vunpack.c.l.b16 %v458
        %v571 = vunpack.c.h.b16 %v458
        %v572 = vunpack.c.l.b16 %v459
        %v573 = vunpack.c.h.b16 %v459
        %v574 = vunpack.c.l.b16 %v460
        %v575 = vunpack.c.h.b16 %v460
        %v576 = vunpack.c.l.b16 %v461
        %v577 = vunpack.c.h.b16 %v461
        %v578 = vunpack.c.l.b16 %v462
        %v579 = vunpack.c.h.b16 %v462
        %v580 = vunpack.c.l.b16 %v463
        %v581 = vunpack.c.h.b16 %v463
        %v582 = vunpack.c.l.b16 %v464
        %v583 = vunpack.c.h.b16 %v464
        %v584 = vunpack.c.l.b16 %v465
        %v585 = vunpack.c.h.b16 %v465
        %v586 = vunpack.c.l.b16 %v466
        %v587 = vunpack.c.h.b16 %v466
        %v588 = vunpack.c.l.b16 %v467
        %v589 = vunpack.c.h.b16 %v467
        %v590 = vunpack.c.l.b16 %v468
        %v591 = vunpack.c.h.b16 %v468
        %v592 = vunpack.c.l.b16 %v469
        %v593 = vunpack.c.h.b16 %v469
        %v594 = vunpack.c.l.b16 %v470
        %v595 = vunpack.c.h.b16 %v470
        %v596 = vunpack.c.l.b16 %v471
        %v597 = vunpack.c.h.b16 %v471
        %v598 = vunpack.c.l.b16 %v472
        %v599 = vunpack.c.h.b16 %v472
        %v600 = vunpack.c.l.b16 %v473
        %v601 = vunpack.c.h.b16 %v473
        %v602 = vpack.c.b16 %v540, %v538
        %v603 = vpack.c.b16 %v541, %v539
        %v604 = vpack.c.b16 %v544, %v542
        %v605 = vpack.c.b16 %v545, %v543
        %v606 = vpack.c.b16 %v548, %v546
        %v607 = vpack.c.b16 %v549, %v547
        %v608 = vpack.c.b16 %v552, %v550
        %v609 = vpack.c.b16 %v553, %v551
        %v610 = vpack.c.b16 %v556, %v554
        %v611 = vpack.c.b16 %v557, %v555
        %v612 = vpack.c.b16 %v560, %v558
        %v613 = vpack.c.b16 %v561, %v559
        %v614 = vpack.c.b16 %v564, %v562
        %v615 = vpack.c.b16 %v565, %v563
        %v616 = vpack.c.b16 %v568, %v566
        %v617 = vpack.c.b16 %v569, %v567
        %v618 = vpack.c.b16 %v572, %v570
        %v619 = vpack.c.b16 %v573, %v571
        %v620 = vpack.c.b16 %v576, %v574
        %v621 = vpack.c.b16 %v577, %v575
        %v622 = vpack.c.b16 %v580, %v578
        %v623 = vpack.c.b16 %v581, %v579
        %v624 = vpack.c.b16 %v584, %v582
        %v625 = vpack.c.b16 %v585, %v583
        %v626 = vpack.c.b16 %v588, %v586
        %v627 = vpack.c.b16 %v589, %v587
        %v628 = vpack.c.b16 %v592, %v590
        %v629 = vpack.c.b16 %v593, %v591
        %v630 = vpack.c.b16 %v596, %v594
        %v631 = vpack.c.b16 %v597, %v595
        %v632 = vpack.c.b16 %v600, %v598
        %v633 = vpack.c.b16 %v601, %v599
        %v698 = vunpack.c.l.b16 %v474
        %v699 = vunpack.c.l.b16 %v475
        %v700 = vunpack.c.l.b16 %v476
        %v701 = vunpack.c.l.b16 %v477
        %v702 = vunpack.c.l.b16 %v478
        %v703 = vunpack.c.l.b16 %v479
        %v704 = vunpack.c.l.b16 %v480
        %v705 = vunpack.c.l.b16 %v481
        %v706 = vunpack.c.l.b16 %v482
        %v707 = vunpack.c.l.b16 %v483
        %v708 = vunpack.c.l.b16 %v484
        %v709 = vunpack.c.l.b16 %v485
        %v710 = vunpack.c.l.b16 %v486
        %v711 = vunpack.c.l.b16 %v487
        %v712 = vunpack.c.l.b16 %v488
        %v713 = vunpack.c.l.b16 %v489
        %v714 = vunpack.c.l.b16 %v490
        %v715 = vunpack.c.l.b16 %v491
        %v716 = vunpack.c.l.b16 %v492
        %v717 = vunpack.c.l.b16 %v493
        %v718 = vunpack.c.l.b16 %v494
        %v719 = vunpack.c.l.b16 %v495
        %v720 = vunpack.c.l.b16 %v496
        %v721 = vunpack.c.l.b16 %v497
        %v722 = vunpack.c.l.b16 %v498
        %v723 = vunpack.c.l.b16 %v499
        %v724 = vunpack.c.l.b16 %v500
        %v725 = vunpack.c.l.b16 %v501
        %v726 = vunpack.c.l.b16 %v502
        %v727 = vunpack.c.l.b16 %v503
        %v728 = vunpack.c.l.b16 %v504
        %v729 = vunpack.c.l.b16 %v505
        %v730 = vpack.c.b16 %v699, %v698
        %v731 = vpack.c.b16 %v701, %v700
        %v732 = vpack.c.b16 %v703, %v702
        %v733 = vpack.c.b16 %v705, %v704
        %v734 = vpack.c.b16 %v707, %v706
        %v735 = vpack.c.b16 %v709, %v708
        %v736 = vpack.c.b16 %v711, %v710
        %v737 = vpack.c.b16 %v713, %v712
        %v738 = vpack.c.b16 %v715, %v714
        %v739 = vpack.c.b16 %v717, %v716
        %v740 = vpack.c.b16 %v719, %v718
        %v741 = vpack.c.b16 %v721, %v720
        %v742 = vpack.c.b16 %v723, %v722
        %v743 = vpack.c.b16 %v725, %v724
        %v744 = vpack.c.b16 %v727, %v726
        %v745 = vpack.c.b16 %v729, %v728
        %762 = vmatprep.subr.bf16.mxu0 0
        %763 = vmatpush1.bf16.msra.mxu0 %v737
        %764 = vmatprep.subr.bf16.mxu0 0
        %765 = vmatpush1.bf16.msra.mxu0 %v736
        %766 = vmatprep.subr.bf16.mxu0 0
        %767 = vmatpush1.bf16.msra.mxu0 %v735
        %768 = vmatprep.subr.bf16.mxu0 0
        %769 = vmatpush1.bf16.msra.mxu0 %v734
        %770 = vmatprep.subr.bf16.mxu0 0
        %771 = vmatpush1.bf16.msra.mxu0 %v733
        %772 = vmatprep.subr.bf16.mxu0 0
        %773 = vmatpush1.bf16.msra.mxu0 %v732
        %774 = vmatprep.subr.bf16.mxu0 0
        %775 = vmatpush1.bf16.msra.mxu0 %v731
        %776 = vmatprep.subr.bf16.mxu0 0
        %777 = vmatpush1.bf16.msra.mxu0 %v730
        %778 = vmatprep.subr.bf16.mxu0 0
        %779 = vmatpush2.bf16.msra.mxu0 %v745
        %780 = vmatprep.subr.bf16.mxu0 0
        %781 = vmatpush2.bf16.msra.mxu0 %v744
        %782 = vmatprep.subr.bf16.mxu0 0
        %783 = vmatpush2.bf16.msra.mxu0 %v743
        %784 = vmatprep.subr.bf16.mxu0 0
        %785 = vmatpush2.bf16.msra.mxu0 %v742
        %786 = vmatprep.subr.bf16.mxu0 0
        %787 = vmatpush2.bf16.msra.mxu0 %v741
        %788 = vmatprep.subr.bf16.mxu0 0
        %789 = vmatpush2.bf16.msra.mxu0 %v740
        %790 = vmatprep.subr.bf16.mxu0 0
        %791 = vmatpush2.bf16.msra.mxu0 %v739
        %792 = vmatprep.subr.bf16.mxu0 0
        %793 = vmatpush2.bf16.msra.mxu0 %v738
        %794 = vmatprep.mubr.bf16.mxu0 %v603
        %795 = vmatmul.mubr.bf16.gmra.mxu0 %v602
        %v796 = vpop.f32.mrf.mxu0
        %v797 = vadd.f32 0.0, %v796
        %v798 = vpop.f32.mrf.mxu0
        %v799 = vpop.f32.mrf.mxu0
        %v800 = vadd.f32 0.0, %v799
        %v801 = vpop.f32.mrf.mxu0
        %802 = vmatprep.mubr.bf16.mxu0 %v605
        %803 = vmatmul.mubr.bf16.gmra.mxu0 %v604
        %v804 = vpop.f32.mrf.mxu0
        %v805 = vadd.f32 0.0, %v804
        %v806 = vpop.f32.mrf.mxu0
        %v807 = vpop.f32.mrf.mxu0
        %v808 = vadd.f32 0.0, %v807
        %v809 = vpop.f32.mrf.mxu0
        %810 = vmatprep.mubr.bf16.mxu0 %v607
        %811 = vmatmul.mubr.bf16.gmra.mxu0 %v606
        %v812 = vpop.f32.mrf.mxu0
        %v813 = vadd.f32 0.0, %v812
        %v814 = vpop.f32.mrf.mxu0
        %v815 = vpop.f32.mrf.mxu0
        %v816 = vadd.f32 0.0, %v815
        %v817 = vpop.f32.mrf.mxu0
        %818 = vmatprep.mubr.bf16.mxu0 %v609
        %819 = vmatmul.mubr.bf16.gmra.mxu0 %v608
        %v820 = vpop.f32.mrf.mxu0
        %v821 = vadd.f32 0.0, %v820
        %v822 = vpop.f32.mrf.mxu0
        %v823 = vpop.f32.mrf.mxu0
        %v824 = vadd.f32 0.0, %v823
        %v825 = vpop.f32.mrf.mxu0
        %826 = vmatprep.mubr.bf16.mxu0 %v611
        %827 = vmatmul.mubr.bf16.gmra.mxu0 %v610
        %v828 = vpop.f32.mrf.mxu0
        %v829 = vadd.f32 0.0, %v828
        %v830 = vpop.f32.mrf.mxu0
        %v831 = vpop.f32.mrf.mxu0
        %v832 = vadd.f32 0.0, %v831
        %v833 = vpop.f32.mrf.mxu0
        %834 = vmatprep.mubr.bf16.mxu0 %v613
        %835 = vmatmul.mubr.bf16.gmra.mxu0 %v612
        %v836 = vpop.f32.mrf.mxu0
        %v837 = vadd.f32 0.0, %v836
        %v838 = vpop.f32.mrf.mxu0
        %v839 = vpop.f32.mrf.mxu0
        %v840 = vadd.f32 0.0, %v839
        %v841 = vpop.f32.mrf.mxu0
        %842 = vmatprep.mubr.bf16.mxu0 %v615
        %843 = vmatmul.mubr.bf16.gmra.mxu0 %v614
        %v844 = vpop.f32.mrf.mxu0
        %v845 = vadd.f32 0.0, %v844
        %v846 = vpop.f32.mrf.mxu0
        %v847 = vpop.f32.mrf.mxu0
        %v848 = vadd.f32 0.0, %v847
        %v849 = vpop.f32.mrf.mxu0
        %850 = vmatprep.mubr.bf16.mxu0 %v617
        %851 = vmatmul.mubr.bf16.gmra.mxu0 %v616
        %v852 = vpop.f32.mrf.mxu0
        %v853 = vadd.f32 0.0, %v852
        %v854 = vpop.f32.mrf.mxu0
        %v855 = vpop.f32.mrf.mxu0
        %v856 = vadd.f32 0.0, %v855
        %v857 = vpop.f32.mrf.mxu0
        %858 = vmatprep.mubr.bf16.mxu0 %v619
        %859 = vmatmul.mubr.bf16.gmra.mxu0 %v618
        %v860 = vpop.f32.mrf.mxu0
        %v861 = vadd.f32 0.0, %v860
        %v862 = vpop.f32.mrf.mxu0
        %v863 = vpop.f32.mrf.mxu0
        %v864 = vadd.f32 0.0, %v863
        %v865 = vpop.f32.mrf.mxu0
        %866 = vmatprep.mubr.bf16.mxu0 %v621
        %867 = vmatmul.mubr.bf16.gmra.mxu0 %v620
        %v868 = vpop.f32.mrf.mxu0
        %v869 = vadd.f32 0.0, %v868
        %v870 = vpop.f32.mrf.mxu0
        %v871 = vpop.f32.mrf.mxu0
        %v872 = vadd.f32 0.0, %v871
        %v873 = vpop.f32.mrf.mxu0
        %874 = vmatprep.mubr.bf16.mxu0 %v623
        %875 = vmatmul.mubr.bf16.gmra.mxu0 %v622
        %v876 = vpop.f32.mrf.mxu0
        %v877 = vadd.f32 0.0, %v876
        %v878 = vpop.f32.mrf.mxu0
        %v879 = vpop.f32.mrf.mxu0
        %v880 = vadd.f32 0.0, %v879
        %v881 = vpop.f32.mrf.mxu0
        %882 = vmatprep.mubr.bf16.mxu0 %v625
        %883 = vmatmul.mubr.bf16.gmra.mxu0 %v624
        %v884 = vpop.f32.mrf.mxu0
        %v885 = vadd.f32 0.0, %v884
        %v886 = vpop.f32.mrf.mxu0
        %v887 = vpop.f32.mrf.mxu0
        %v888 = vadd.f32 0.0, %v887
        %v889 = vpop.f32.mrf.mxu0
        %890 = vmatprep.mubr.bf16.mxu0 %v627
        %891 = vmatmul.mubr.bf16.gmra.mxu0 %v626
        %v892 = vpop.f32.mrf.mxu0
        %v893 = vadd.f32 0.0, %v892
        %v894 = vpop.f32.mrf.mxu0
        %v895 = vpop.f32.mrf.mxu0
        %v896 = vadd.f32 0.0, %v895
        %v897 = vpop.f32.mrf.mxu0
        %898 = vmatprep.mubr.bf16.mxu0 %v629
        %899 = vmatmul.mubr.bf16.gmra.mxu0 %v628
        %v900 = vpop.f32.mrf.mxu0
        %v901 = vadd.f32 0.0, %v900
        %v902 = vpop.f32.mrf.mxu0
        %v903 = vpop.f32.mrf.mxu0
        %v904 = vadd.f32 0.0, %v903
        %v905 = vpop.f32.mrf.mxu0
        %906 = vmatprep.mubr.bf16.mxu0 %v631
        %907 = vmatmul.mubr.bf16.gmra.mxu0 %v630
        %v908 = vpop.f32.mrf.mxu0
        %v909 = vadd.f32 0.0, %v908
        %v910 = vpop.f32.mrf.mxu0
        %v911 = vpop.f32.mrf.mxu0
        %v912 = vadd.f32 0.0, %v911
        %v913 = vpop.f32.mrf.mxu0
        %914 = vmatprep.mubr.bf16.mxu0 %v633
        %915 = vmatmul.mubr.bf16.gmra.mxu0 %v632
        %v916 = vpop.f32.mrf.mxu0
        %v917 = vadd.f32 0.0, %v916
        %v918 = vpop.f32.mrf.mxu0
        %v919 = vpop.f32.mrf.mxu0
        %v920 = vadd.f32 0.0, %v919
        %v921 = vpop.f32.mrf.mxu0
        %922 = vdwg.mxu0
        %v923 = vadd.f32 %v410, %v797
        %v924 = vadd.f32 %v411, %v800
        %v925 = vadd.f32 %v412, %v805
        %v926 = vadd.f32 %v413, %v808
        %v927 = vadd.f32 %v414, %v813
        %v928 = vadd.f32 %v415, %v816
        %v929 = vadd.f32 %v416, %v821
        %v930 = vadd.f32 %v417, %v824
        %v931 = vadd.f32 %v418, %v829
        %v932 = vadd.f32 %v419, %v832
        %v933 = vadd.f32 %v420, %v837
        %v934 = vadd.f32 %v421, %v840
        %v935 = vadd.f32 %v422, %v845
        %v936 = vadd.f32 %v423, %v848
        %v937 = vadd.f32 %v424, %v853
        %v938 = vadd.f32 %v425, %v856
        %v939 = vadd.f32 %v426, %v861
        %v940 = vadd.f32 %v427, %v864
        %v941 = vadd.f32 %v428, %v869
        %v942 = vadd.f32 %v429, %v872
        %v943 = vadd.f32 %v430, %v877
        %v944 = vadd.f32 %v431, %v880
        %v945 = vadd.f32 %v432, %v885
        %v946 = vadd.f32 %v433, %v888
        %v947 = vadd.f32 %v434, %v893
        %v948 = vadd.f32 %v435, %v896
        %v949 = vadd.f32 %v436, %v901
        %v950 = vadd.f32 %v437, %v904
        %v951 = vadd.f32 %v438, %v909
        %v952 = vadd.f32 %v439, %v912
        %v953 = vadd.f32 %v440, %v917
        %v954 = vadd.f32 %v441, %v920
        %955 = vst [vmem:[#allocation2] sm:$0xff] %v923
        %956 = vst [vmem:[#allocation2 + $0x8] sm:$0xff] %v924
        %957 = vst [vmem:[#allocation2 + $0x10] sm:$0xff] %v925
        %958 = vst [vmem:[#allocation2 + $0x18] sm:$0xff] %v926
        %959 = vst [vmem:[#allocation2 + $0x20] sm:$0xff] %v927
        %960 = vst [vmem:[#allocation2 + $0x28] sm:$0xff] %v928
        %961 = vst [vmem:[#allocation2 + $0x30] sm:$0xff] %v929
        %962 = vst [vmem:[#allocation2 + $0x38] sm:$0xff] %v930
        %963 = vst [vmem:[#allocation2 + $0x40] sm:$0xff] %v931
        %964 = vst [vmem:[#allocation2 + $0x48] sm:$0xff] %v932
        %965 = vst [vmem:[#allocation2 + $0x50] sm:$0xff] %v933
        %966 = vst [vmem:[#allocation2 + $0x58] sm:$0xff] %v934
        %967 = vst [vmem:[#allocation2 + $0x60] sm:$0xff] %v935
        %968 = vst [vmem:[#allocation2 + $0x68] sm:$0xff] %v936
        %969 = vst [vmem:[#allocation2 + $0x70] sm:$0xff] %v937
        %970 = vst [vmem:[#allocation2 + $0x78] sm:$0xff] %v938
        %971 = vst [vmem:[#allocation2 + $0x80] sm:$0xff] %v939
        %972 = vst [vmem:[#allocation2 + $0x88] sm:$0xff] %v940
        %973 = vst [vmem:[#allocation2 + $0x90] sm:$0xff] %v941
        %974 = vst [vmem:[#allocation2 + $0x98] sm:$0xff] %v942
        %975 = vst [vmem:[#allocation2 + $0xa0] sm:$0xff] %v943
        %976 = vst [vmem:[#allocation2 + $0xa8] sm:$0xff] %v944
        %977 = vst [vmem:[#allocation2 + $0xb0] sm:$0xff] %v945
        %978 = vst [vmem:[#allocation2 + $0xb8] sm:$0xff] %v946
        %979 = vst [vmem:[#allocation2 + $0xc0] sm:$0xff] %v947
        %980 = vst [vmem:[#allocation2 + $0xc8] sm:$0xff] %v948
        %981 = vst [vmem:[#allocation2 + $0xd0] sm:$0xff] %v949
        %982 = vst [vmem:[#allocation2 + $0xd8] sm:$0xff] %v950
        %983 = vst [vmem:[#allocation2 + $0xe0] sm:$0xff] %v951
        %984 = vst [vmem:[#allocation2 + $0xe8] sm:$0xff] %v952
        %985 = vst [vmem:[#allocation2 + $0xf0] sm:$0xff] %v953
        %986 = vst [vmem:[#allocation2 + $0xf8] sm:$0xff] %v954
        %p987 = scmp.eq.s32.totalorder %s19, 1
        // Predicated region
        $region75: #{sag_gcn_forward.7} parent=65 // pred_check
          %p988 = pneg %p987
        $region76: #{sag_gcn_forward.7} parent=65 // pred_check_branch
          %990 = sbr.rel (%p988) target = $region78
        $region77: #{sag_gcn_forward.7} parent=65 // pred_region
          %v991 = vld [vmem:[#allocation2] sm:$0xff]
          %v992 = vld [vmem:[#allocation2 + $0x8] sm:$0xff]
          %v993 = vld [vmem:[#allocation2 + $0x10] sm:$0xff]
          %v994 = vld [vmem:[#allocation2 + $0x18] sm:$0xff]
          %v995 = vld [vmem:[#allocation2 + $0x20] sm:$0xff]
          %v996 = vld [vmem:[#allocation2 + $0x28] sm:$0xff]
          %v997 = vld [vmem:[#allocation2 + $0x30] sm:$0xff]
          %v998 = vld [vmem:[#allocation2 + $0x38] sm:$0xff]
          %v999 = vld [vmem:[#allocation2 + $0x40] sm:$0xff]
          %v1000 = vld [vmem:[#allocation2 + $0x48] sm:$0xff]
          %v1001 = vld [vmem:[#allocation2 + $0x50] sm:$0xff]
          %v1002 = vld [vmem:[#allocation2 + $0x58] sm:$0xff]
          %v1003 = vld [vmem:[#allocation2 + $0x60] sm:$0xff]
          %v1004 = vld [vmem:[#allocation2 + $0x68] sm:$0xff]
          %v1005 = vld [vmem:[#allocation2 + $0x70] sm:$0xff]
          %v1006 = vld [vmem:[#allocation2 + $0x78] sm:$0xff]
          %v1007 = vld [vmem:[#allocation2 + $0x80] sm:$0xff]
          %v1008 = vld [vmem:[#allocation2 + $0x88] sm:$0xff]
          %v1009 = vld [vmem:[#allocation2 + $0x90] sm:$0xff]
          %v1010 = vld [vmem:[#allocation2 + $0x98] sm:$0xff]
          %v1011 = vld [vmem:[#allocation2 + $0xa0] sm:$0xff]
          %v1012 = vld [vmem:[#allocation2 + $0xa8] sm:$0xff]
          %v1013 = vld [vmem:[#allocation2 + $0xb0] sm:$0xff]
          %v1014 = vld [vmem:[#allocation2 + $0xb8] sm:$0xff]
          %v1015 = vld [vmem:[#allocation2 + $0xc0] sm:$0xff]
          %v1016 = vld [vmem:[#allocation2 + $0xc8] sm:$0xff]
          %v1017 = vld [vmem:[#allocation2 + $0xd0] sm:$0xff]
          %v1018 = vld [vmem:[#allocation2 + $0xd8] sm:$0xff]
          %v1019 = vld [vmem:[#allocation2 + $0xe0] sm:$0xff]
          %v1020 = vld [vmem:[#allocation2 + $0xe8] sm:$0xff]
          %v1021 = vld [vmem:[#allocation2 + $0xf0] sm:$0xff]
          %v1022 = vld [vmem:[#allocation2 + $0xf8] sm:$0xff]
          %v1023 = vld [vmem:[%s2] sm:$0x1]
          %v1025 = vlaneseq
          %v1026 = vshrl.u32 %v1025, 7
          %v1027 = vsub.s32 0, %v1026
          %v1028 = vrot.slane %v1023, %v1027
          %v1030 = vadd.f32 %v991, %v1028
          %v1031 = vadd.f32 %v992, %v1028
          %v1032 = vadd.f32 %v993, %v1028
          %v1033 = vadd.f32 %v994, %v1028
          %v1034 = vadd.f32 %v995, %v1028
          %v1035 = vadd.f32 %v996, %v1028
          %v1036 = vadd.f32 %v997, %v1028
          %v1037 = vadd.f32 %v998, %v1028
          %v1038 = vadd.f32 %v999, %v1028
          %v1039 = vadd.f32 %v1000, %v1028
          %v1040 = vadd.f32 %v1001, %v1028
          %v1041 = vadd.f32 %v1002, %v1028
          %v1042 = vadd.f32 %v1003, %v1028
          %v1043 = vadd.f32 %v1004, %v1028
          %v1044 = vadd.f32 %v1005, %v1028
          %v1045 = vadd.f32 %v1006, %v1028
          %v1046 = vadd.f32 %v1007, %v1028
          %v1047 = vadd.f32 %v1008, %v1028
          %v1048 = vadd.f32 %v1009, %v1028
          %v1049 = vadd.f32 %v1010, %v1028
          %v1050 = vadd.f32 %v1011, %v1028
          %v1051 = vadd.f32 %v1012, %v1028
          %v1052 = vadd.f32 %v1013, %v1028
          %v1053 = vadd.f32 %v1014, %v1028
          %v1054 = vadd.f32 %v1015, %v1028
          %v1055 = vadd.f32 %v1016, %v1028
          %v1056 = vadd.f32 %v1017, %v1028
          %v1057 = vadd.f32 %v1018, %v1028
          %v1058 = vadd.f32 %v1019, %v1028
          %v1059 = vadd.f32 %v1020, %v1028
          %v1060 = vadd.f32 %v1021, %v1028
          %v1061 = vadd.f32 %v1022, %v1028
          %1062 = vst [vmem:[%s371] sm:$0xff] %v1030
          %1063 = vst [vmem:[%s371 + $0x8] sm:$0xff] %v1031
          %1064 = vst [vmem:[%s371 + $0x10] sm:$0xff] %v1032
          %1065 = vst [vmem:[%s371 + $0x18] sm:$0xff] %v1033
          %1066 = vst [vmem:[%s371 + $0x20] sm:$0xff] %v1034
          %1067 = vst [vmem:[%s371 + $0x28] sm:$0xff] %v1035
          %1068 = vst [vmem:[%s371 + $0x30] sm:$0xff] %v1036
          %1069 = vst [vmem:[%s371 + $0x38] sm:$0xff] %v1037
          %1070 = vst [vmem:[%s371 + $0x40] sm:$0xff] %v1038
          %1071 = vst [vmem:[%s371 + $0x48] sm:$0xff] %v1039
          %1072 = vst [vmem:[%s371 + $0x50] sm:$0xff] %v1040
          %1073 = vst [vmem:[%s371 + $0x58] sm:$0xff] %v1041
          %1074 = vst [vmem:[%s371 + $0x60] sm:$0xff] %v1042
          %1075 = vst [vmem:[%s371 + $0x68] sm:$0xff] %v1043
          %1076 = vst [vmem:[%s371 + $0x70] sm:$0xff] %v1044
          %1077 = vst [vmem:[%s371 + $0x78] sm:$0xff] %v1045
          %1078 = vst [vmem:[%s371 + $0x80] sm:$0xff] %v1046
          %1079 = vst [vmem:[%s371 + $0x88] sm:$0xff] %v1047
          %1080 = vst [vmem:[%s371 + $0x90] sm:$0xff] %v1048
          %1081 = vst [vmem:[%s371 + $0x98] sm:$0xff] %v1049
          %1082 = vst [vmem:[%s371 + $0xa0] sm:$0xff] %v1050
          %1083 = vst [vmem:[%s371 + $0xa8] sm:$0xff] %v1051
          %1084 = vst [vmem:[%s371 + $0xb0] sm:$0xff] %v1052
          %1085 = vst [vmem:[%s371 + $0xb8] sm:$0xff] %v1053
          %1086 = vst [vmem:[%s371 + $0xc0] sm:$0xff] %v1054
          %1087 = vst [vmem:[%s371 + $0xc8] sm:$0xff] %v1055
          %1088 = vst [vmem:[%s371 + $0xd0] sm:$0xff] %v1056
          %1089 = vst [vmem:[%s371 + $0xd8] sm:$0xff] %v1057
          %1090 = vst [vmem:[%s371 + $0xe0] sm:$0xff] %v1058
          %1091 = vst [vmem:[%s371 + $0xe8] sm:$0xff] %v1059
          %1092 = vst [vmem:[%s371 + $0xf0] sm:$0xff] %v1060
          %1093 = vst [vmem:[%s371 + $0xf8] sm:$0xff] %v1061
        $region78: #{sag_gcn_forward.7} parent=65 // pred_fallthru
          _
        %s1094 = smul.u32 32, %s18
        %p1095 = scmp.lt.s32.totalorder %s1094, 63
        %s1096 = scalar_select %p1095, %s1094, 63
        %s1097 = smul.addr %s1096, 8
        %s1098 = scalar_lea.vmem %s3, %s1097
        // Predicated region
        $region79: #{sag_gcn_forward.7} parent=65 // pred_check
          %p1099 = pneg %p119
        $region80: #{sag_gcn_forward.7} parent=65 // pred_check_branch
          %1101 = sbr.rel (%p1099) target = $region82
        $region81: #{sag_gcn_forward.7} parent=65 // pred_region
          %s1102 = smul.u32 32, %s18
        $region82: #{sag_gcn_forward.7} parent=65 // pred_fallthru
          _
      $region66: #{sag_gcn_forward.7} parent=5 // pred_fallthru
        _
      %p1103 = scmp.le.s32.totalorder 2, %s9
      // Predicated region
      $region83: #{sag_gcn_forward.7} parent=5 // pred_check
        %p1104 = pneg %p1103
      $region84: #{sag_gcn_forward.7} parent=5 // pred_check_branch
        %1106 = sbr.rel (%p1104) target = $region86
      $region85: #{sag_gcn_forward.7} parent=5 // pred_region
        %s1107 = ssub.s32 %s9, 2
        // Predicated region
        $region87: #{sag_gcn_forward.7} parent=85 // pred_check
          %p1108 = pneg %p125
        $region88: #{sag_gcn_forward.7} parent=85 // pred_check_branch
          %1110 = sbr.rel (%p1108) target = $region90
        $region89: #{sag_gcn_forward.7} parent=85 // pred_region
          %s1111 = smul.u32 32, %s20
          %p1112 = scmp.lt.s32.totalorder %s1111, 63
          %s1113 = scalar_select %p1112, %s1111, 63
          %s1114 = smul.addr %s1113, 8
          %s1115 = scalar_lea.vmem %s3, %s1114
        $region90: #{sag_gcn_forward.7} parent=85 // pred_fallthru
          _
      $region86: #{sag_gcn_forward.7} parent=5 // pred_fallthru
        _
    $region6: #{sag_gcn_forward.7} parent=1 // loop_footer
      %s13 = sadd.s32 1, %s9
    $region7: #{sag_gcn_forward.7} parent=1 // loop_footer_branch
      %8 = sbr.rel target = $region3
    $region8: #{sag_gcn_forward.7} parent=1 // loop_exit
      _

</llo_original>
